<compile_context>
chip_gen: v6e
topology: v6e:2x2x1
jax: 0.10.0
libtpu: 0.0.40
codegen_flags: <defaults>
</compile_context>

<pallas_src>
import functools
import math

import jax
import jax.numpy as jnp
from jax.experimental import pallas as pl
from jax.experimental.pallas import tpu as pltpu


def _round_up(x, m):
    return (x + m - 1) // m * m


def _flash_kernel(q_ref, k_ref, v_ref, m_ref, o_ref,
                  m_sc, l_sc, acc_sc, *, scale, has_kpad):
    # q_ref: (1, tq, dk_p)   k_ref: (1, tk, dk_p)   v_ref: (1, tk, dv_p)
    # m_ref: (1, tq, tk) int8 {0=keep, 1=masked, 2=key padding}
    # o_ref: (1, tq, dv_p)
    # scratch: m_sc/l_sc (tq, 1) f32, acc_sc (tq, dv_p) f32
    ki = pl.program_id(2)

    @pl.when(ki == 0)
    def _():
        m_sc[...] = jnp.full_like(m_sc, -jnp.inf)
        l_sc[...] = jnp.zeros_like(l_sc)
        acc_sc[...] = jnp.zeros_like(acc_sc)

    # Fold the 1/sqrt(dk) scale into Q: O(tq*dk) instead of O(tq*tk) multiplies.
    q = q_ref[0] * scale                      # keeps input dtype (bf16-friendly)
    k = k_ref[0]
    # Q @ K^T without an explicit transpose: contract the last dim of both.
    s = jax.lax.dot_general(q, k, (((1,), (1,)), ((), ())),
                            preferred_element_type=jnp.float32)   # (tq, tk) f32

    m = m_ref[0]                              # int8
    if has_kpad:
        s = jnp.where(m == 1, jnp.float32(-1e9), s)    # masked_fill_(-1e9)
        s = jnp.where(m == 2, jnp.float32(-1e30), s)   # key padding -> weight 0
    else:
        s = jnp.where(m != 0, jnp.float32(-1e9), s)    # masked_fill_(-1e9)

    # Online softmax update.
    m_prev = m_sc[...]
    m_new = jnp.maximum(m_prev, jnp.max(s, axis=-1, keepdims=True))
    alpha = jnp.exp(m_prev - m_new)                    # (tq, 1)
    p = jnp.exp(s - m_new)                             # (tq, tk) unnormalized
    l_sc[...] = alpha * l_sc[...] + jnp.sum(p, axis=-1, keepdims=True)
    acc_sc[...] = alpha * acc_sc[...] + jnp.dot(
        p.astype(v_ref.dtype), v_ref[0], preferred_element_type=jnp.float32)
    m_sc[...] = m_new

    @pl.when(ki == pl.num_programs(2) - 1)
    def _():
        # Deferred normalization on the (tq, dv) result; divide goes to the EUP.
        inv = pl.reciprocal(l_sc[...], approx=True)
        o_ref[0] = (acc_sc[...] * inv).astype(o_ref.dtype)


def scaled_dot_product_attention(Q, K, V, attn_mask, *, tq=None, tk=None):
    """Q:[B,H,Lq,dk], K:[B,H,Lk,dk], V:[B,H,Lk,dv], attn_mask:[B,H,Lq,Lk] bool."""
    B, H, Lq, dk = Q.shape
    Lk = K.shape[2]
    dv = V.shape[3]
    BH = B * H

    # Lane-axis dims padded to 128; tiles sized for all TPU generations
    # (double-buffered working set << 16 MiB, so also fine on v7x's 64 MiB VMEM).
    dk_p = _round_up(dk, 128)
    dv_p = _round_up(dv, 128)
    if tq is None:
        tq = min(256, _round_up(Lq, 8))
    if tk is None:
        tk = min(512, _round_up(Lk, 128))
    Lq_p = _round_up(Lq, tq)
    Lk_p = _round_up(Lk, tk)
    nq = Lq_p // tq
    nk = Lk_p // tk
    has_kpad = Lk_p != Lk

    q = jnp.pad(Q.reshape(BH, Lq, dk), ((0, 0), (0, Lq_p - Lq), (0, dk_p - dk)))
    k = jnp.pad(K.reshape(BH, Lk, dk), ((0, 0), (0, Lk_p - Lk), (0, dk_p - dk)))
    v = jnp.pad(V.reshape(BH, Lk, dv), ((0, 0), (0, Lk_p - Lk), (0, dv_p - dv)))

    # int8 mask (4x less HBM traffic than int32); padded keys tagged with 2.
    m = attn_mask.reshape(BH, Lq, Lk).astype(jnp.int8)
    m = jnp.pad(m, ((0, 0), (0, Lq_p - Lq), (0, 0)), constant_values=0)
    m = jnp.pad(m, ((0, 0), (0, 0), (0, Lk_p - Lk)), constant_values=2)

    scale = 1.0 / math.sqrt(dk)   # real d_k, as in the PyTorch module
    kernel = functools.partial(_flash_kernel, scale=scale, has_kpad=has_kpad)

    out = pl.pallas_call(
        kernel,
        out_shape=jax.ShapeDtypeStruct((BH, Lq_p, dv_p), Q.dtype),
        grid_spec=pltpu.PrefetchScalarGridSpec(
            num_scalar_prefetch=0,
            grid=(BH, nq, nk),
            in_specs=[
                pl.BlockSpec((1, tq, dk_p), lambda b, qi, ki: (b, qi, 0)),
                pl.BlockSpec((1, tk, dk_p), lambda b, qi, ki: (b, ki, 0)),
                pl.BlockSpec((1, tk, dv_p), lambda b, qi, ki: (b, ki, 0)),
                pl.BlockSpec((1, tq, tk), lambda b, qi, ki: (b, qi, ki)),
            ],
            out_specs=pl.BlockSpec((1, tq, dv_p), lambda b, qi, ki: (b, qi, 0)),
            scratch_shapes=[
                pltpu.VMEM((tq, 1), jnp.float32),      # running max
                pltpu.VMEM((tq, 1), jnp.float32),      # running sum
                pltpu.VMEM((tq, dv_p), jnp.float32),   # accumulator
            ],
        ),
        compiler_params=pltpu.CompilerParams(
            dimension_semantics=("parallel", "parallel", "arbitrary"),
            vmem_limit_bytes=32 * 1024 * 1024,
        ),
    )(q, k, v, m)

    return out[:, :Lq, :dv].reshape(B, H, Lq, dv)


def _reference(Q, K, V, attn_mask):
    dk = Q.shape[-1]
    scores = jnp.einsum("bhqd,bhkd->bhqk", Q, K) / jnp.sqrt(jnp.float32(dk))
    scores = jnp.where(attn_mask, -1e9, scores)
    w = jax.nn.softmax(scores, axis=-1)
    return jnp.einsum("bhqk,bhkd->bhqd", w, V)


if __name__ == "__main__":
    key = jax.random.PRNGKey(0)
    k1, k2, k3, k4, k5, k6, k7, k8 = jax.random.split(key, 8)

    # Case 1: multi-tile flash path (2 q-tiles x 2 k-tiles), dk/dv padded 64->128.
    B, H, Lq, Lk, dk, dv = 2, 4, 256, 256, 64, 64
    Q = jax.random.normal(k1, (B, H, Lq, dk), dtype=jnp.float32)
    K = jax.random.normal(k2, (B, H, Lk, dk), dtype=jnp.float32)
    V = jax.random.normal(k3, (B, H, Lk, dv), dtype=jnp.float32)
    attn_mask = jax.random.bernoulli(k4, p=0.25, shape=(B, H, Lq, Lk))

    out = scaled_dot_product_attention(Q, K, V, attn_mask, tq=128, tk=128)
    out = jax.block_until_ready(out)
    ref = _reference(Q, K, V, attn_mask)
    assert out.shape == (B, H, Lq, dv)
    assert jnp.allclose(out, ref, atol=2e-3, rtol=2e-3), \
        float(jnp.max(jnp.abs(out - ref)))

    # Case 2: ragged Lk (key-padding path) + a fully-masked row (uniform weights).
    B2, H2, Lq2, Lk2, dk2, dv2 = 2, 2, 128, 96, 64, 64
    Q2 = jax.random.normal(k5, (B2, H2, Lq2, dk2), dtype=jnp.float32)
    K2 = jax.random.normal(k6, (B2, H2, Lk2, dk2), dtype=jnp.float32)
    V2 = jax.random.normal(k7, (B2, H2, Lk2, dv2), dtype=jnp.float32)
    mask2 = jax.random.bernoulli(k8, p=0.25, shape=(B2, H2, Lq2, Lk2))
    mask2 = mask2.at[0, 0, 5, :].set(True)

    out2 = scaled_dot_product_attention(Q2, K2, V2, mask2)
    out2 = jax.block_until_ready(out2)
    ref2 = _reference(Q2, K2, V2, mask2)
    assert jnp.allclose(out2, ref2, atol=2e-3, rtol=2e-3), \
        float(jnp.max(jnp.abs(out2 - ref2)))

    print("KERNEL_OK")
</pallas_src>

<mosaic_0001>
module attributes {stable_mosaic.version = 11 : i64} {
  func.func @_flash_kernel(%arg0: i32, %arg1: i32, %arg2: i32, %arg3: memref<1x128x128xf32, #tpu.memory_space<vmem>>, %arg4: memref<1x128x128xf32, #tpu.memory_space<vmem>>, %arg5: memref<1x128x128xf32, #tpu.memory_space<vmem>>, %arg6: memref<1x128x128xi8, #tpu.memory_space<vmem>>, %arg7: memref<1x128x128xf32, #tpu.memory_space<vmem>>, %arg8: memref<128x1xf32, #tpu.memory_space<vmem>>, %arg9: memref<128x1xf32, #tpu.memory_space<vmem>>, %arg10: memref<128x128xf32, #tpu.memory_space<vmem>>) attributes {dimension_semantics = [#tpu.dimension_semantics<parallel>, #tpu.dimension_semantics<parallel>, #tpu.dimension_semantics<arbitrary>], iteration_bounds = array<i64: 8, 2, 2>, scalar_prefetch = 0 : i64, scratch_operands = 3 : i64, tpu.core_type = #tpu.core_type<tc>, window_params = [{transform_indices = @transform_0, window_bounds = array<i64: 1, 128, 128>}, {transform_indices = @transform_1, window_bounds = array<i64: 1, 128, 128>}, {transform_indices = @transform_2, window_bounds = array<i64: 1, 128, 128>}, {transform_indices = @transform_3, window_bounds = array<i64: 1, 128, 128>}, {transform_indices = @transform_4, window_bounds = array<i64: 1, 128, 128>}]} {
    %c0_i32 = arith.constant 0 : i32
    %0 = arith.cmpi eq, %arg2, %c0_i32 : i32
    %1 = arith.extui %0 : i1 to i32
    %c0_i32_0 = arith.constant 0 : i32
    %2 = arith.cmpi ne, %1, %c0_i32_0 : i32
    scf.if %2 {
      %cst_30 = arith.constant 0xFF800000 : f32
      %43 = vector.broadcast %cst_30 : f32 to vector<128x1xf32>
      %c0_31 = arith.constant 0 : index
      %c0_32 = arith.constant 0 : index
      %44 = vector.load %arg8[%c0_31, %c0_32] : memref<128x1xf32, #tpu.memory_space<vmem>>, vector<128x1xf32>
      tpu.vector_store %arg8[%c0_31, %c0_32], %43 {strides = array<i32>} : memref<128x1xf32, #tpu.memory_space<vmem>>, vector<128x1xf32>,
      %cst_33 = arith.constant 0.000000e+00 : f32
      %45 = vector.broadcast %cst_33 : f32 to vector<128x1xf32>
      %c0_34 = arith.constant 0 : index
      %c0_35 = arith.constant 0 : index
      %46 = vector.load %arg9[%c0_34, %c0_35] : memref<128x1xf32, #tpu.memory_space<vmem>>, vector<128x1xf32>
      tpu.vector_store %arg9[%c0_34, %c0_35], %45 {strides = array<i32>} : memref<128x1xf32, #tpu.memory_space<vmem>>, vector<128x1xf32>,
      %cst_36 = arith.constant 0.000000e+00 : f32
      %47 = vector.broadcast %cst_36 : f32 to vector<128x128xf32>
      %c0_37 = arith.constant 0 : index
      %c0_38 = arith.constant 0 : index
      %48 = vector.load %arg10[%c0_37, %c0_38] : memref<128x128xf32, #tpu.memory_space<vmem>>, vector<128x128xf32>
      tpu.vector_store %arg10[%c0_37, %c0_38], %47 {strides = array<i32>} : memref<128x128xf32, #tpu.memory_space<vmem>>, vector<128x128xf32>,
    } else {
    }
    %c0 = arith.constant 0 : index
    %c0_1 = arith.constant 0 : index
    %c0_2 = arith.constant 0 : index
    %3 = vector.load %arg3[%c0, %c0_1, %c0_2] : memref<1x128x128xf32, #tpu.memory_space<vmem>>, vector<1x128x128xf32>
    %4 = vector.shape_cast %3 : vector<1x128x128xf32> to vector<128x128xf32>
    %cst = arith.constant 1.250000e-01 : f32
    %5 = vector.broadcast %cst : f32 to vector<128x128xf32>
    %6 = arith.mulf %4, %5 : vector<128x128xf32>
    %c0_3 = arith.constant 0 : index
    %c0_4 = arith.constant 0 : index
    %c0_5 = arith.constant 0 : index
    %7 = vector.load %arg4[%c0_3, %c0_4, %c0_5] : memref<1x128x128xf32, #tpu.memory_space<vmem>>, vector<1x128x128xf32>
    %8 = vector.shape_cast %7 : vector<1x128x128xf32> to vector<128x128xf32>
    %cst_6 = arith.constant dense<0.000000e+00> : vector<128x128xf32>
    %9 = tpu.matmul %6, %8, %cst_6 {dimension_numbers = #tpu.dot_dimension_numbers<[1], [1], [0], [0], [0, 0, 1, 0], [], []>} : vector<128x128xf32>, vector<128x128xf32>, vector<128x128xf32> -> vector<128x128xf32>
    %c0_7 = arith.constant 0 : index
    %c0_8 = arith.constant 0 : index
    %c0_9 = arith.constant 0 : index
    %10 = vector.load %arg6[%c0_7, %c0_8, %c0_9] : memref<1x128x128xi8, #tpu.memory_space<vmem>>, vector<1x128x128xi8>
    %11 = vector.shape_cast %10 : vector<1x128x128xi8> to vector<128x128xi8>
    %c0_i8 = arith.constant 0 : i8
    %12 = vector.broadcast %c0_i8 : i8 to vector<128x128xi8>
    %13 = arith.cmpi ne, %11, %12 : vector<128x128xi8>
    %cst_10 = arith.constant -1.000000e+09 : f32
    %14 = vector.broadcast %cst_10 : f32 to vector<128x128xf32>
    %15 = arith.select %13, %14, %9 : vector<128x128xi1>, vector<128x128xf32>
    %c0_11 = arith.constant 0 : index
    %c0_12 = arith.constant 0 : index
    %16 = vector.load %arg8[%c0_11, %c0_12] : memref<128x1xf32, #tpu.memory_space<vmem>>, vector<128x1xf32>
    %cst_13 = arith.constant dense<0xFF800000> : vector<128xf32>
    %17 = vector.multi_reduction <maximumf>, %15, %cst_13 [1] : vector<128x128xf32> to vector<128xf32>
    %18 = vector.shape_cast %17 : vector<128xf32> to vector<128x1xf32>
    %19 = arith.maximumf %16, %18 : vector<128x1xf32>
    %20 = arith.subf %16, %19 : vector<128x1xf32>
    %21 = math.exp %20 : vector<128x1xf32>
    %22 = vector.broadcast %19 : vector<128x1xf32> to vector<128x128xf32>
    %23 = arith.subf %15, %22 : vector<128x128xf32>
    %24 = math.exp %23 : vector<128x128xf32>
    %c0_14 = arith.constant 0 : index
    %c0_15 = arith.constant 0 : index
    %25 = vector.load %arg9[%c0_14, %c0_15] : memref<128x1xf32, #tpu.memory_space<vmem>>, vector<128x1xf32>
    %26 = arith.mulf %21, %25 : vector<128x1xf32>
    %cst_16 = arith.constant dense<0.000000e+00> : vector<128xf32>
    %27 = vector.multi_reduction <add>, %24, %cst_16 [1] : vector<128x128xf32> to vector<128xf32>
    %28 = vector.shape_cast %27 : vector<128xf32> to vector<128x1xf32>
    %29 = arith.addf %26, %28 : vector<128x1xf32>
    %c0_17 = arith.constant 0 : index
    %c0_18 = arith.constant 0 : index
    %30 = vector.load %arg9[%c0_17, %c0_18] : memref<128x1xf32, #tpu.memory_space<vmem>>, vector<128x1xf32>
    tpu.vector_store %arg9[%c0_17, %c0_18], %29 {strides = array<i32>} : memref<128x1xf32, #tpu.memory_space<vmem>>, vector<128x1xf32>,
    %c0_19 = arith.constant 0 : index
    %c0_20 = arith.constant 0 : index
    %31 = vector.load %arg10[%c0_19, %c0_20] : memref<128x128xf32, #tpu.memory_space<vmem>>, vector<128x128xf32>
    %32 = vector.broadcast %21 : vector<128x1xf32> to vector<128x128xf32>
    %33 = arith.mulf %32, %31 : vector<128x128xf32>
    %c0_21 = arith.constant 0 : index
    %c0_22 = arith.constant 0 : index
    %c0_23 = arith.constant 0 : index
    %34 = vector.load %arg5[%c0_21, %c0_22, %c0_23] : memref<1x128x128xf32, #tpu.memory_space<vmem>>, vector<1x128x128xf32>
    %35 = vector.shape_cast %34 : vector<1x128x128xf32> to vector<128x128xf32>
    %cst_24 = arith.constant dense<0.000000e+00> : vector<128x128xf32>
    %36 = tpu.matmul %24, %35, %cst_24 {dimension_numbers = #tpu.dot_dimension_numbers<[1], [0], [0], [1], [0, 0, 1, 1], [], []>} : vector<128x128xf32>, vector<128x128xf32>, vector<128x128xf32> -> vector<128x128xf32>
    %37 = arith.addf %33, %36 : vector<128x128xf32>
    %c0_25 = arith.constant 0 : index
    %c0_26 = arith.constant 0 : index
    %38 = vector.load %arg10[%c0_25, %c0_26] : memref<128x128xf32, #tpu.memory_space<vmem>>, vector<128x128xf32>
    tpu.vector_store %arg10[%c0_25, %c0_26], %37 {strides = array<i32>} : memref<128x128xf32, #tpu.memory_space<vmem>>, vector<128x128xf32>,
    %c0_27 = arith.constant 0 : index
    %c0_28 = arith.constant 0 : index
    %39 = vector.load %arg8[%c0_27, %c0_28] : memref<128x1xf32, #tpu.memory_space<vmem>>, vector<128x1xf32>
    tpu.vector_store %arg8[%c0_27, %c0_28], %19 {strides = array<i32>} : memref<128x1xf32, #tpu.memory_space<vmem>>, vector<128x1xf32>,
    %c1_i32 = arith.constant 1 : i32
    %40 = arith.cmpi eq, %arg2, %c1_i32 : i32
    %41 = arith.extui %40 : i1 to i32
    %c0_i32_29 = arith.constant 0 : i32
    %42 = arith.cmpi ne, %41, %c0_i32_29 : i32
    scf.if %42 {
      %c0_30 = arith.constant 0 : index
      %c0_31 = arith.constant 0 : index
      %43 = vector.load %arg9[%c0_30, %c0_31] : memref<128x1xf32, #tpu.memory_space<vmem>>, vector<128x1xf32>
      %44 = tpu.reciprocal %43 {approx = true} : vector<128x1xf32> -> vector<128x1xf32>
      %c0_32 = arith.constant 0 : index
      %c0_33 = arith.constant 0 : index
      %45 = vector.load %arg10[%c0_32, %c0_33] : memref<128x128xf32, #tpu.memory_space<vmem>>, vector<128x128xf32>
      %46 = vector.broadcast %44 : vector<128x1xf32> to vector<128x128xf32>
      %47 = arith.mulf %45, %46 : vector<128x128xf32>
      %c0_34 = arith.constant 0 : index
      %c0_35 = arith.constant 0 : index
      %c0_36 = arith.constant 0 : index
      %48 = vector.load %arg7[%c0_34, %c0_35, %c0_36] : memref<1x128x128xf32, #tpu.memory_space<vmem>>, vector<1x128x128xf32>
      %49 = vector.shape_cast %48 : vector<1x128x128xf32> to vector<128x128xf32>
      %50 = vector.shape_cast %47 : vector<128x128xf32> to vector<1x128x128xf32>
      tpu.vector_store %arg7[%c0_34, %c0_35, %c0_36], %50 {strides = array<i32>} : memref<1x128x128xf32, #tpu.memory_space<vmem>>, vector<1x128x128xf32>,
    } else {
    }
    return
  }
  func.func @transform_0(%arg0: i32, %arg1: i32, %arg2: i32) -> (i32, i32, i32) {
    %c0_i32 = arith.constant 0 : i32
    %c0_i32_0 = arith.constant 0 : i32
    return %arg0, %arg1, %c0_i32 : i32, i32, i32
  }
  func.func @transform_1(%arg0: i32, %arg1: i32, %arg2: i32) -> (i32, i32, i32) {
    %c0_i32 = arith.constant 0 : i32
    %c0_i32_0 = arith.constant 0 : i32
    return %arg0, %arg2, %c0_i32 : i32, i32, i32
  }
  func.func @transform_2(%arg0: i32, %arg1: i32, %arg2: i32) -> (i32, i32, i32) {
    %c0_i32 = arith.constant 0 : i32
    %c0_i32_0 = arith.constant 0 : i32
    return %arg0, %arg2, %c0_i32 : i32, i32, i32
  }
  func.func @transform_3(%arg0: i32, %arg1: i32, %arg2: i32) -> (i32, i32, i32) {
    %c0_i32 = arith.constant 0 : i32
    return %arg0, %arg1, %arg2 : i32, i32, i32
  }
  func.func @transform_4(%arg0: i32, %arg1: i32, %arg2: i32) -> (i32, i32, i32) {
    %c0_i32 = arith.constant 0 : i32
    %c0_i32_0 = arith.constant 0 : i32
    return %arg0, %arg1, %c0_i32 : i32, i32, i32
  }
}

</mosaic_0001>

<llo_original>
// kernel: tpu_custom_call.1
$region0: #{tpu_custom_call.1}
  #allocation0 [shape = 'u32[]', space=smem, size = 0x4, offset = 0x4, fixed_abs, tag = 'smem constant byte address 0x4 - core index']
  #allocation1 [shape = 'u32[144,128]{1,0:T(1,128)}', space=vmem, size = 0x12000, scoped, tag = 'internal scratch']
  #allocation2 [shape = 'f32[128,1]{1,0:T(8,128)}', space=vmem, size = 0x10000, scoped, tag = 'scratch operand']
  #allocation3 [shape = 'f32[128,1]{1,0:T(8,128)}', space=vmem, size = 0x10000, scoped, tag = 'scratch operand']
  #allocation4 [shape = 'f32[128,128]{1,0:T(8,128)}', space=vmem, size = 0x10000, scoped, tag = 'scratch operand']
  %s0 = inlined_call_operand.hbm [shape: f32[8,256,128], index: 0, kind: input, shape index: {}]
  %s1 = inlined_call_operand.hbm [shape: f32[8,256,128], index: 1, kind: input, shape index: {}]
  %s2 = inlined_call_operand.hbm [shape: f32[8,256,128], index: 2, kind: input, shape index: {}]
  %s3 = inlined_call_operand.hbm [shape: s8[8,256,256], index: 3, kind: input, shape index: {}]
  %s4 = inlined_call_operand.hbm [shape: f32[8,256,128], index: 4, kind: output, shape index: {}]
  %s5 = sld [smem:[#allocation0]]
  $region73: #{tpu_custom_call.1} parent=0
    _
  %s7 = ssub.s32 1, %s5
  %s8 = scalar_select 0, %s7, %s5
  $region1: #{tpu_custom_call.1} parent=0
    #allocation5 [shape = 'u8[131072]{0}', space=vmem, size = 0x20000, scoped, tag = 'input window, operand 0']
    #allocation6 [shape = 's32[2]{0}', space=sflag, size = 0x8, scoped, tag = 'scoped memory for tpu_custom_call.1']
    #allocation7 [shape = 's32[2]{0}', space=sflag, size = 0x8, scoped, tag = 'scoped memory for tpu_custom_call.1']
    #allocation8 [shape = 'u8[131072]{0}', space=vmem, size = 0x20000, scoped, tag = 'input window, operand 1']
    #allocation9 [shape = 's32[2]{0}', space=sflag, size = 0x8, scoped, tag = 'scoped memory for tpu_custom_call.1']
    #allocation10 [shape = 'u8[131072]{0}', space=vmem, size = 0x20000, scoped, tag = 'input window, operand 2']
    #allocation11 [shape = 'u8[32768]{0}', space=vmem, size = 0x8000, scoped, tag = 'input window, operand 3']
    #allocation12 [shape = 's32[2]{0}', space=sflag, size = 0x8, scoped, tag = 'scoped memory for tpu_custom_call.1']
    #allocation13 [shape = 'u8[131072]{0}', space=vmem, size = 0x20000, scoped, tag = 'output window, operand 0']
    %9 = vsyncpa [#allocation6], 0
    %s10 = scalar_lea.sflag [#allocation6], 1
    %11 = vsyncpa %s10, 0
    %12 = vsyncpa [#allocation9], 0
    %s13 = scalar_lea.sflag [#allocation9], 1
    %14 = vsyncpa %s13, 0
    %15 = vsyncpa [#allocation12], 0
    %s16 = scalar_lea.sflag [#allocation12], 1
    %17 = vsyncpa %s16, 0
    %18 = vsyncpa [#allocation7], 0
    %s19 = scalar_lea.sflag [#allocation7], 1
    %20 = vsyncpa %s19, 0
    loop: start=0, step=1, limit=34
    $region2: #{tpu_custom_call.1} parent=1 // loop_pre_header
      _
    $region3: #{tpu_custom_call.1} parent=1 // loop_header
      %s22 = sphi 0, %s26
      %p23 = scmp.ge.s32.totalorder %s22, 34
      %s29 = sphi 0, %s48
      %s30 = sphi 0, %s44
      %s31 = sphi 0, %s40
      %s32 = sphi 0, %s29
      %s33 = sphi 0, %s30
      %s34 = sphi 0, %s31
      %s35 = sphi 0, %s32
      %s36 = sphi 0, %s33
      %s37 = sphi 0, %s34
      %s53 = sphi 0, %s55
      %s56 = sphi 0, %s53
      %s57 = sphi 0, %s56
      %s73 = sphi 0, %s57
      %s81 = sphi 0, %s83
      %s84 = sphi 0, %s81
      %s85 = sphi 0, %s84
      %s101 = sphi 0, %s85
      %s109 = sphi 0, %s111
      %s112 = sphi 0, %s109
      %s113 = sphi 0, %s112
      %s129 = sphi 0, %s113
      %s139 = sphi 0, %s141
      %s142 = sphi 0, %s139
      %s143 = sphi 0, %s142
      %s159 = sphi 0, %s143
      %s167 = sphi 0, %s169
      %s170 = sphi 0, %s167
      %s171 = sphi 0, %s170
      %s187 = sphi 0, %s171
    $region4: #{tpu_custom_call.1} parent=1 // loop_header_branch
      %25 = sbr.rel (%p23) target = $region8
    $region5: #{tpu_custom_call.1} parent=1 // loop_body
      %s27 = ssub.s32 %s22, 1
      %s28 = ssub.s32 %s22, 2
      %s38 = sadd.s32 1, %s31
      %p39 = scmp.ge.s32.totalorder %s38, 2
      %s40 = scalar_select %p39, 0, %s38
      %s41 = sadd.s32 1, %s30
      %s42 = scalar_select %p39, %s41, %s30
      %p43 = scmp.ge.s32.totalorder %s42, 2
      %s44 = scalar_select %p43, 0, %s42
      %s45 = sadd.s32 1, %s29
      %s46 = scalar_select %p43, %s45, %s29
      %p47 = scmp.ge.s32.totalorder %s46, 8
      %s48 = scalar_select %p47, 0, %s46
      %s49 = ssub.s32 %s29, %s48
      %s50 = ssub.s32 %s30, %s44
      %s51 = sor.u32 %s49, %s50
      %p52 = scmp.eq.s32.totalorder %s51, 0
      %s54 = sadd.s32 %s53, 1
      %s55 = scalar_select %p52, %s53, %s54
      %p58 = pneg %p52
      %p59 = scmp.eq.s32.totalorder %s22, 31
      %p60 = por %p58, %p59
      %p61 = scmp.ne.s32.totalorder %s53, %s56
      %p62 = scmp.eq.s32.totalorder %s22, 0
      %p63 = por %p61, %p62
      %p64 = scmp.ne.s32.totalorder %s53, %s56
      %p65 = scmp.eq.s32.totalorder %s27, 31
      %p66 = por %p64, %p65
      %p67 = scmp.ne.s32.totalorder %s56, %s57
      %p68 = scmp.eq.s32.totalorder %s27, 0
      %p69 = por %p67, %p68
      %p70 = scmp.ne.s32.totalorder %s56, %s57
      %p71 = scmp.eq.s32.totalorder %s28, 31
      %p72 = por %p70, %p71
      %p74 = scmp.ne.s32.totalorder %s57, %s73
      %p75 = scmp.eq.s32.totalorder %s28, 0
      %p76 = por %p74, %p75
      %s77 = ssub.s32 %s29, %s48
      %s78 = ssub.s32 %s31, %s40
      %s79 = sor.u32 %s77, %s78
      %p80 = scmp.eq.s32.totalorder %s79, 0
      %s82 = sadd.s32 %s81, 1
      %s83 = scalar_select %p80, %s81, %s82
      %p86 = pneg %p80
      %p87 = scmp.eq.s32.totalorder %s22, 31
      %p88 = por %p86, %p87
      %p89 = scmp.ne.s32.totalorder %s81, %s84
      %p90 = scmp.eq.s32.totalorder %s22, 0
      %p91 = por %p89, %p90
      %p92 = scmp.ne.s32.totalorder %s81, %s84
      %p93 = scmp.eq.s32.totalorder %s27, 31
      %p94 = por %p92, %p93
      %p95 = scmp.ne.s32.totalorder %s84, %s85
      %p96 = scmp.eq.s32.totalorder %s27, 0
      %p97 = por %p95, %p96
      %p98 = scmp.ne.s32.totalorder %s84, %s85
      %p99 = scmp.eq.s32.totalorder %s28, 31
      %p100 = por %p98, %p99
      %p102 = scmp.ne.s32.totalorder %s85, %s101
      %p103 = scmp.eq.s32.totalorder %s28, 0
      %p104 = por %p102, %p103
      %s105 = ssub.s32 %s29, %s48
      %s106 = ssub.s32 %s31, %s40
      %s107 = sor.u32 %s105, %s106
      %p108 = scmp.eq.s32.totalorder %s107, 0
      %s110 = sadd.s32 %s109, 1
      %s111 = scalar_select %p108, %s109, %s110
      %p114 = pneg %p108
      %p115 = scmp.eq.s32.totalorder %s22, 31
      %p116 = por %p114, %p115
      %p117 = scmp.ne.s32.totalorder %s109, %s112
      %p118 = scmp.eq.s32.totalorder %s22, 0
      %p119 = por %p117, %p118
      %p120 = scmp.ne.s32.totalorder %s109, %s112
      %p121 = scmp.eq.s32.totalorder %s27, 31
      %p122 = por %p120, %p121
      %p123 = scmp.ne.s32.totalorder %s112, %s113
      %p124 = scmp.eq.s32.totalorder %s27, 0
      %p125 = por %p123, %p124
      %p126 = scmp.ne.s32.totalorder %s112, %s113
      %p127 = scmp.eq.s32.totalorder %s28, 31
      %p128 = por %p126, %p127
      %p130 = scmp.ne.s32.totalorder %s113, %s129
      %p131 = scmp.eq.s32.totalorder %s28, 0
      %p132 = por %p130, %p131
      %s133 = ssub.s32 %s29, %s48
      %s134 = ssub.s32 %s30, %s44
      %s135 = sor.u32 %s133, %s134
      %s136 = ssub.s32 %s31, %s40
      %s137 = sor.u32 %s135, %s136
      %p138 = scmp.eq.s32.totalorder %s137, 0
      %s140 = sadd.s32 %s139, 1
      %s141 = scalar_select %p138, %s139, %s140
      %p144 = pneg %p138
      %p145 = scmp.eq.s32.totalorder %s22, 31
      %p146 = por %p144, %p145
      %p147 = scmp.ne.s32.totalorder %s139, %s142
      %p148 = scmp.eq.s32.totalorder %s22, 0
      %p149 = por %p147, %p148
      %p150 = scmp.ne.s32.totalorder %s139, %s142
      %p151 = scmp.eq.s32.totalorder %s27, 31
      %p152 = por %p150, %p151
      %p153 = scmp.ne.s32.totalorder %s142, %s143
      %p154 = scmp.eq.s32.totalorder %s27, 0
      %p155 = por %p153, %p154
      %p156 = scmp.ne.s32.totalorder %s142, %s143
      %p157 = scmp.eq.s32.totalorder %s28, 31
      %p158 = por %p156, %p157
      %p160 = scmp.ne.s32.totalorder %s143, %s159
      %p161 = scmp.eq.s32.totalorder %s28, 0
      %p162 = por %p160, %p161
      %s163 = ssub.s32 %s29, %s48
      %s164 = ssub.s32 %s30, %s44
      %s165 = sor.u32 %s163, %s164
      %p166 = scmp.eq.s32.totalorder %s165, 0
      %s168 = sadd.s32 %s167, 1
      %s169 = scalar_select %p166, %s167, %s168
      %p172 = pneg %p166
      %p173 = scmp.eq.s32.totalorder %s22, 31
      %p174 = por %p172, %p173
      %p175 = scmp.ne.s32.totalorder %s167, %s170
      %p176 = scmp.eq.s32.totalorder %s22, 0
      %p177 = por %p175, %p176
      %p178 = scmp.ne.s32.totalorder %s167, %s170
      %p179 = scmp.eq.s32.totalorder %s27, 31
      %p180 = por %p178, %p179
      %p181 = scmp.ne.s32.totalorder %s170, %s171
      %p182 = scmp.eq.s32.totalorder %s27, 0
      %p183 = por %p181, %p182
      %p184 = scmp.ne.s32.totalorder %s170, %s171
      %p185 = scmp.eq.s32.totalorder %s28, 31
      %p186 = por %p184, %p185
      %p188 = scmp.ne.s32.totalorder %s171, %s187
      %p189 = scmp.eq.s32.totalorder %s28, 0
      %p190 = por %p188, %p189
      %p191 = scmp.le.s32.totalorder 1, %s22
      %p192 = scmp.lt.s32.totalorder %s22, 33
      %p193 = pnand %p191, %p192
      %p194 = pneg %p193
      // Predicated region
      $region9: #{tpu_custom_call.1} parent=5 // pred_check
        _
      $region10: #{tpu_custom_call.1} parent=5 // pred_check_branch
        %196 = sbr.rel (%p193) target = $region12
      $region11: #{tpu_custom_call.1} parent=5 // pred_region
        %s197 = ssub.s32 %s22, 1
      $region12: #{tpu_custom_call.1} parent=5 // pred_fallthru
        _
      %p198 = scmp.lt.s32.totalorder %s22, 32
      // Predicated region
      $region13: #{tpu_custom_call.1} parent=5 // pred_check
        %p199 = pneg %p198
      $region14: #{tpu_custom_call.1} parent=5 // pred_check_branch
        %201 = sbr.rel (%p199) target = $region16
      $region15: #{tpu_custom_call.1} parent=5 // pred_region
        // Predicated region
        $region17: #{tpu_custom_call.1} parent=15 // pred_check
          %p202 = pneg %p63
        $region18: #{tpu_custom_call.1} parent=15 // pred_check_branch
          %204 = sbr.rel (%p202) target = $region20
        $region19: #{tpu_custom_call.1} parent=15 // pred_region
          %s205 = sand.u32 %s53, 1
          %s206 = scalar_lea.sflag [#allocation6], %s205
          %s207 = sand.u32 %s53, 1
          %s208 = smul.addr %s207, 128
          %s209 = scalar_lea.vmem [#allocation5], %s208
          %s210 = smul.u32 16, %s30
          %s212 = ssub.s32 2048, 2048
          %213 = vsyncadd %s206, %s212
          %s214 = smul.addr %s29, 32
          %s215 = sadd.s32 %s210, %s214
          %s216 = smul.addr %s215, 128
          %s217 = scalar_lea.hbm %s0, %s216
          %s218 = sshll.u32 %s209, 4
          %s219 = int_to_ptr.vmem [resolvable:$true] %s218
          %224 = dma.hbm_to_vmem [thread:$0]  %s217, 2048, %s219, %s206, 128, 128, 8
        $region20: #{tpu_custom_call.1} parent=15 // pred_fallthru
          _
        // Predicated region
        $region21: #{tpu_custom_call.1} parent=15 // pred_check
          %p225 = pneg %p91
        $region22: #{tpu_custom_call.1} parent=15 // pred_check_branch
          %227 = sbr.rel (%p225) target = $region24
        $region23: #{tpu_custom_call.1} parent=15 // pred_region
          %s228 = sand.u32 %s22, 1
          %s229 = scalar_lea.sflag [#allocation9], %s228
          %s230 = sand.u32 %s81, 1
          %s231 = smul.addr %s230, 128
          %s232 = scalar_lea.vmem [#allocation8], %s231
          %s233 = smul.u32 16, %s31
          %s235 = ssub.s32 2048, 2048
          %236 = vsyncadd %s229, %s235
          %s237 = smul.addr %s29, 32
          %s238 = sadd.s32 %s233, %s237
          %s239 = smul.addr %s238, 128
          %s240 = scalar_lea.hbm %s1, %s239
          %s241 = sshll.u32 %s232, 4
          %s242 = int_to_ptr.vmem [resolvable:$true] %s241
          %247 = dma.hbm_to_vmem [thread:$0]  %s240, 2048, %s242, %s229, 128, 128, 8
        $region24: #{tpu_custom_call.1} parent=15 // pred_fallthru
          _
        // Predicated region
        $region25: #{tpu_custom_call.1} parent=15 // pred_check
          %p248 = pneg %p119
        $region26: #{tpu_custom_call.1} parent=15 // pred_check_branch
          %250 = sbr.rel (%p248) target = $region28
        $region27: #{tpu_custom_call.1} parent=15 // pred_region
          %s251 = sand.u32 %s22, 1
          %s252 = scalar_lea.sflag [#allocation9], %s251
          %s253 = sand.u32 %s109, 1
          %s254 = smul.addr %s253, 128
          %s255 = scalar_lea.vmem [#allocation10], %s254
          %s256 = smul.u32 16, %s31
          %s258 = ssub.s32 2048, 2048
          %259 = vsyncadd %s252, %s258
          %s260 = smul.addr %s29, 32
          %s261 = sadd.s32 %s256, %s260
          %s262 = smul.addr %s261, 128
          %s263 = scalar_lea.hbm %s2, %s262
          %s264 = sshll.u32 %s255, 4
          %s265 = int_to_ptr.vmem [resolvable:$true] %s264
          %270 = dma.hbm_to_vmem [thread:$0]  %s263, 2048, %s265, %s252, 128, 128, 8
        $region28: #{tpu_custom_call.1} parent=15 // pred_fallthru
          _
        // Predicated region
        $region29: #{tpu_custom_call.1} parent=15 // pred_check
          %p271 = pneg %p149
        $region30: #{tpu_custom_call.1} parent=15 // pred_check_branch
          %273 = sbr.rel (%p271) target = $region32
        $region31: #{tpu_custom_call.1} parent=15 // pred_region
          %s274 = sand.u32 %s139, 1
          %s275 = scalar_lea.sflag [#allocation12], %s274
          %s276 = sand.u32 %s139, 1
          %s277 = smul.addr %s276, 32
          %s278 = scalar_lea.vmem [#allocation11], %s277
          %s279 = smul.u32 4, %s30
          %s281 = ssub.s32 512, 512
          %282 = vsyncadd %s275, %s281
          %s283 = smul.addr %s279, 2
          %s284 = sadd.s32 %s31, %s283
          %s285 = smul.addr %s29, 16
          %s286 = sadd.s32 %s284, %s285
          %s287 = smul.addr %s286, 128
          %s288 = scalar_lea.hbm %s3, %s287
          %s289 = sshll.u32 %s278, 4
          %s290 = int_to_ptr.vmem [resolvable:$true] %s289
          %295 = dma.hbm_to_vmem [thread:$0]  %s288, 512, %s290, %s275, 256, 128, 8
        $region32: #{tpu_custom_call.1} parent=15 // pred_fallthru
          _
      $region16: #{tpu_custom_call.1} parent=5 // pred_fallthru
        _
      %p296 = scmp.le.s32.totalorder 1, %s22
      %p297 = scmp.lt.s32.totalorder %s22, 33
      %p298 = pnand %p296, %p297
      %p299 = pneg %p298
      // Predicated region
      $region33: #{tpu_custom_call.1} parent=5 // pred_check
        _
      $region34: #{tpu_custom_call.1} parent=5 // pred_check_branch
        %301 = sbr.rel (%p298) target = $region36
      $region35: #{tpu_custom_call.1} parent=5 // pred_region
        %s302 = ssub.s32 %s22, 1
        %s303 = sand.u32 %s56, 1
        %s304 = scalar_lea.sflag [#allocation6], %s303
        %s305 = sand.u32 %s56, 1
        %s306 = smul.addr %s305, 128
        %s307 = scalar_lea.vmem [#allocation5], %s306
        // Predicated region
        $region37: #{tpu_custom_call.1} parent=35 // pred_check
          %p308 = pneg %p69
        $region38: #{tpu_custom_call.1} parent=35 // pred_check_branch
          %310 = sbr.rel (%p308) target = $region40
        $region39: #{tpu_custom_call.1} parent=35 // pred_region
          %311 = dma.done %s304, 2048
        $region40: #{tpu_custom_call.1} parent=35 // pred_fallthru
          _
        %s312 = sand.u32 %s27, 1
        %s313 = scalar_lea.sflag [#allocation9], %s312
        %s314 = sand.u32 %s84, 1
        %s315 = smul.addr %s314, 128
        %s316 = scalar_lea.vmem [#allocation8], %s315
        // Predicated region
        $region41: #{tpu_custom_call.1} parent=35 // pred_check
          %p317 = pneg %p97
        $region42: #{tpu_custom_call.1} parent=35 // pred_check_branch
          %319 = sbr.rel (%p317) target = $region44
        $region43: #{tpu_custom_call.1} parent=35 // pred_region
          %320 = dma.done %s313, 2048
        $region44: #{tpu_custom_call.1} parent=35 // pred_fallthru
          _
        %s321 = sand.u32 %s27, 1
        %s322 = scalar_lea.sflag [#allocation9], %s321
        %s323 = sand.u32 %s112, 1
        %s324 = smul.addr %s323, 128
        %s325 = scalar_lea.vmem [#allocation10], %s324
        // Predicated region
        $region45: #{tpu_custom_call.1} parent=35 // pred_check
          %p326 = pneg %p125
        $region46: #{tpu_custom_call.1} parent=35 // pred_check_branch
          %328 = sbr.rel (%p326) target = $region48
        $region47: #{tpu_custom_call.1} parent=35 // pred_region
          %329 = dma.done %s322, 2048
        $region48: #{tpu_custom_call.1} parent=35 // pred_fallthru
          _
        %s330 = sand.u32 %s142, 1
        %s331 = scalar_lea.sflag [#allocation12], %s330
        %s332 = sand.u32 %s142, 1
        %s333 = smul.addr %s332, 32
        %s334 = scalar_lea.vmem [#allocation11], %s333
        // Predicated region
        $region49: #{tpu_custom_call.1} parent=35 // pred_check
          %p335 = pneg %p155
        $region50: #{tpu_custom_call.1} parent=35 // pred_check_branch
          %337 = sbr.rel (%p335) target = $region52
        $region51: #{tpu_custom_call.1} parent=35 // pred_region
          %338 = dma.done %s331, 512
        $region52: #{tpu_custom_call.1} parent=35 // pred_fallthru
          _
        %s339 = sand.u32 %s56, 1
        %s340 = scalar_lea.sflag [#allocation6], %s339
        %s341 = sand.u32 %s56, 1
        %s342 = smul.addr %s341, 128
        %s343 = scalar_lea.vmem [#allocation5], %s342
        %p344 = pneg %p69
        %p345 = pneg %p66
        %s346 = sand.u32 %s27, 1
        %s347 = scalar_lea.sflag [#allocation9], %s346
        %s348 = sand.u32 %s84, 1
        %s349 = smul.addr %s348, 128
        %s350 = scalar_lea.vmem [#allocation8], %s349
        %p351 = pneg %p97
        %p352 = pneg %p94
        %s353 = sand.u32 %s27, 1
        %s354 = scalar_lea.sflag [#allocation9], %s353
        %s355 = sand.u32 %s112, 1
        %s356 = smul.addr %s355, 128
        %s357 = scalar_lea.vmem [#allocation10], %s356
        %p358 = pneg %p125
        %p359 = pneg %p122
        %s360 = sand.u32 %s142, 1
        %s361 = scalar_lea.sflag [#allocation12], %s360
        %s362 = sand.u32 %s142, 1
        %s363 = smul.addr %s362, 32
        %s364 = scalar_lea.vmem [#allocation11], %s363
        %p365 = pneg %p155
        %p366 = pneg %p152
        %p367 = pneg %p183
        %p368 = pneg %p180
        %s369 = sand.u32 %s170, 1
        %s370 = scalar_lea.sflag [#allocation7], %s369
        %s371 = sand.u32 %s170, 1
        %s372 = smul.addr %s371, 128
        %s373 = scalar_lea.vmem [#allocation13], %s372
        %s374 = smul.u32 16, %s33
        %s375 = smul.u32 16, %s34
        %s376 = smul.u32 16, %s34
        %s377 = smul.u32 4, %s33
        %s378 = smul.u32 16, %s33
        %p381 = scmp.eq.s32.totalorder %s34, 0
        // Predicated region
        $region53: #{tpu_custom_call.1} parent=35 // pred_check
          %p382 = pneg %p381
        $region54: #{tpu_custom_call.1} parent=35 // pred_check_branch
          %384 = sbr.rel (%p382) target = $region56
        $region55: #{tpu_custom_call.1} parent=35 // pred_region
          %vm385 = vcmask 7168
          %386 = vst.msk [vmem:[#allocation2] sm:$0xff] %vm385, -inf
          %387 = vst.msk [vmem:[#allocation2 + $0x8] sm:$0xff] %vm385, -inf
          %388 = vst.msk [vmem:[#allocation2 + $0x10] sm:$0xff] %vm385, -inf
          %389 = vst.msk [vmem:[#allocation2 + $0x18] sm:$0xff] %vm385, -inf
          %390 = vst.msk [vmem:[#allocation2 + $0x20] sm:$0xff] %vm385, -inf
          %391 = vst.msk [vmem:[#allocation2 + $0x28] sm:$0xff] %vm385, -inf
          %392 = vst.msk [vmem:[#allocation2 + $0x30] sm:$0xff] %vm385, -inf
          %393 = vst.msk [vmem:[#allocation2 + $0x38] sm:$0xff] %vm385, -inf
          %394 = vst.msk [vmem:[#allocation2 + $0x40] sm:$0xff] %vm385, -inf
          %395 = vst.msk [vmem:[#allocation2 + $0x48] sm:$0xff] %vm385, -inf
          %396 = vst.msk [vmem:[#allocation2 + $0x50] sm:$0xff] %vm385, -inf
          %397 = vst.msk [vmem:[#allocation2 + $0x58] sm:$0xff] %vm385, -inf
          %398 = vst.msk [vmem:[#allocation2 + $0x60] sm:$0xff] %vm385, -inf
          %399 = vst.msk [vmem:[#allocation2 + $0x68] sm:$0xff] %vm385, -inf
          %400 = vst.msk [vmem:[#allocation2 + $0x70] sm:$0xff] %vm385, -inf
          %401 = vst.msk [vmem:[#allocation2 + $0x78] sm:$0xff] %vm385, -inf
          %402 = vst.msk [vmem:[#allocation3] sm:$0xff] %vm385, 0.0
          %403 = vst.msk [vmem:[#allocation3 + $0x8] sm:$0xff] %vm385, 0.0
          %404 = vst.msk [vmem:[#allocation3 + $0x10] sm:$0xff] %vm385, 0.0
          %405 = vst.msk [vmem:[#allocation3 + $0x18] sm:$0xff] %vm385, 0.0
          %406 = vst.msk [vmem:[#allocation3 + $0x20] sm:$0xff] %vm385, 0.0
          %407 = vst.msk [vmem:[#allocation3 + $0x28] sm:$0xff] %vm385, 0.0
          %408 = vst.msk [vmem:[#allocation3 + $0x30] sm:$0xff] %vm385, 0.0
          %409 = vst.msk [vmem:[#allocation3 + $0x38] sm:$0xff] %vm385, 0.0
          %410 = vst.msk [vmem:[#allocation3 + $0x40] sm:$0xff] %vm385, 0.0
          %411 = vst.msk [vmem:[#allocation3 + $0x48] sm:$0xff] %vm385, 0.0
          %412 = vst.msk [vmem:[#allocation3 + $0x50] sm:$0xff] %vm385, 0.0
          %413 = vst.msk [vmem:[#allocation3 + $0x58] sm:$0xff] %vm385, 0.0
          %414 = vst.msk [vmem:[#allocation3 + $0x60] sm:$0xff] %vm385, 0.0
          %415 = vst.msk [vmem:[#allocation3 + $0x68] sm:$0xff] %vm385, 0.0
          %416 = vst.msk [vmem:[#allocation3 + $0x70] sm:$0xff] %vm385, 0.0
          %417 = vst.msk [vmem:[#allocation3 + $0x78] sm:$0xff] %vm385, 0.0
          %418 = vst [vmem:[#allocation4] sm:$0xff] 0.0
          %419 = vst [vmem:[#allocation4 + $0x8] sm:$0xff] 0.0
          %420 = vst [vmem:[#allocation4 + $0x10] sm:$0xff] 0.0
          %421 = vst [vmem:[#allocation4 + $0x18] sm:$0xff] 0.0
          %422 = vst [vmem:[#allocation4 + $0x20] sm:$0xff] 0.0
          %423 = vst [vmem:[#allocation4 + $0x28] sm:$0xff] 0.0
          %424 = vst [vmem:[#allocation4 + $0x30] sm:$0xff] 0.0
          %425 = vst [vmem:[#allocation4 + $0x38] sm:$0xff] 0.0
          %426 = vst [vmem:[#allocation4 + $0x40] sm:$0xff] 0.0
          %427 = vst [vmem:[#allocation4 + $0x48] sm:$0xff] 0.0
          %428 = vst [vmem:[#allocation4 + $0x50] sm:$0xff] 0.0
          %429 = vst [vmem:[#allocation4 + $0x58] sm:$0xff] 0.0
          %430 = vst [vmem:[#allocation4 + $0x60] sm:$0xff] 0.0
          %431 = vst [vmem:[#allocation4 + $0x68] sm:$0xff] 0.0
          %432 = vst [vmem:[#allocation4 + $0x70] sm:$0xff] 0.0
          %433 = vst [vmem:[#allocation4 + $0x78] sm:$0xff] 0.0
        $region56: #{tpu_custom_call.1} parent=35 // pred_fallthru
          _
        %v434 = vld [vmem:[%s307] sm:$0xff]
        %v435 = vld [vmem:[%s307 + $0x8] sm:$0xff]
        %v436 = vld [vmem:[%s307 + $0x10] sm:$0xff]
        %v437 = vld [vmem:[%s307 + $0x18] sm:$0xff]
        %v438 = vld [vmem:[%s307 + $0x20] sm:$0xff]
        %v439 = vld [vmem:[%s307 + $0x28] sm:$0xff]
        %v440 = vld [vmem:[%s307 + $0x30] sm:$0xff]
        %v441 = vld [vmem:[%s307 + $0x38] sm:$0xff]
        %v442 = vld [vmem:[%s307 + $0x40] sm:$0xff]
        %v443 = vld [vmem:[%s307 + $0x48] sm:$0xff]
        %v444 = vld [vmem:[%s307 + $0x50] sm:$0xff]
        %v445 = vld [vmem:[%s307 + $0x58] sm:$0xff]
        %v446 = vld [vmem:[%s307 + $0x60] sm:$0xff]
        %v447 = vld [vmem:[%s307 + $0x68] sm:$0xff]
        %v448 = vld [vmem:[%s307 + $0x70] sm:$0xff]
        %v449 = vld [vmem:[%s307 + $0x78] sm:$0xff]
        %v450 = vmul.f32 %v434, 0.125
        %v451 = vmul.f32 %v435, 0.125
        %v452 = vmul.f32 %v436, 0.125
        %v453 = vmul.f32 %v437, 0.125
        %v454 = vmul.f32 %v438, 0.125
        %v455 = vmul.f32 %v439, 0.125
        %v456 = vmul.f32 %v440, 0.125
        %v457 = vmul.f32 %v441, 0.125
        %v458 = vmul.f32 %v442, 0.125
        %v459 = vmul.f32 %v443, 0.125
        %v460 = vmul.f32 %v444, 0.125
        %v461 = vmul.f32 %v445, 0.125
        %v462 = vmul.f32 %v446, 0.125
        %v463 = vmul.f32 %v447, 0.125
        %v464 = vmul.f32 %v448, 0.125
        %v465 = vmul.f32 %v449, 0.125
        %v466 = vld [vmem:[%s316] sm:$0xff]
        %v467 = vld [vmem:[%s316 + $0x8] sm:$0xff]
        %v468 = vld [vmem:[%s316 + $0x10] sm:$0xff]
        %v469 = vld [vmem:[%s316 + $0x18] sm:$0xff]
        %v470 = vld [vmem:[%s316 + $0x20] sm:$0xff]
        %v471 = vld [vmem:[%s316 + $0x28] sm:$0xff]
        %v472 = vld [vmem:[%s316 + $0x30] sm:$0xff]
        %v473 = vld [vmem:[%s316 + $0x38] sm:$0xff]
        %v474 = vld [vmem:[%s316 + $0x40] sm:$0xff]
        %v475 = vld [vmem:[%s316 + $0x48] sm:$0xff]
        %v476 = vld [vmem:[%s316 + $0x50] sm:$0xff]
        %v477 = vld [vmem:[%s316 + $0x58] sm:$0xff]
        %v478 = vld [vmem:[%s316 + $0x60] sm:$0xff]
        %v479 = vld [vmem:[%s316 + $0x68] sm:$0xff]
        %v480 = vld [vmem:[%s316 + $0x70] sm:$0xff]
        %v481 = vld [vmem:[%s316 + $0x78] sm:$0xff]
        %482 = vmatprep.subr.mxu0 0.0
        %483 = vmatpush1.xpose.msra.mxu0 %v481
        %484 = vmatprep.subr.mxu0 0.0
        %485 = vmatpush1.xpose.msra.mxu0 %v480
        %486 = vmatprep.subr.mxu0 0.0
        %487 = vmatpush1.xpose.msra.mxu0 %v479
        %488 = vmatprep.subr.mxu0 0.0
        %489 = vmatpush1.xpose.msra.mxu0 %v478
        %490 = vmatprep.subr.mxu0 0.0
        %491 = vmatpush1.xpose.msra.mxu0 %v477
        %492 = vmatprep.subr.mxu0 0.0
        %493 = vmatpush1.xpose.msra.mxu0 %v476
        %494 = vmatprep.subr.mxu0 0.0
        %495 = vmatpush1.xpose.msra.mxu0 %v475
        %496 = vmatprep.subr.mxu0 0.0
        %497 = vmatpush1.xpose.msra.mxu0 %v474
        %498 = vmatprep.subr.mxu0 0.0
        %499 = vmatpush1.xpose.msra.mxu0 %v473
        %500 = vmatprep.subr.mxu0 0.0
        %501 = vmatpush1.xpose.msra.mxu0 %v472
        %502 = vmatprep.subr.mxu0 0.0
        %503 = vmatpush1.xpose.msra.mxu0 %v471
        %504 = vmatprep.subr.mxu0 0.0
        %505 = vmatpush1.xpose.msra.mxu0 %v470
        %506 = vmatprep.subr.mxu0 0.0
        %507 = vmatpush1.xpose.msra.mxu0 %v469
        %508 = vmatprep.subr.mxu0 0.0
        %509 = vmatpush1.xpose.msra.mxu0 %v468
        %510 = vmatprep.subr.mxu0 0.0
        %511 = vmatpush1.xpose.msra.mxu0 %v467
        %512 = vmatprep.subr.mxu0 0.0
        %513 = vmatpush1.xpose.msra.mxu0 %v466
        %514 = vmatprep.subr.mxu0 0.0
        %515 = vmatpush2.xpose.msra.mxu0 0.0
        %516 = vmatprep.subr.mxu0 0.0
        %517 = vmatpush2.xpose.msra.mxu0 0.0
        %518 = vmatprep.subr.mxu0 0.0
        %519 = vmatpush2.xpose.msra.mxu0 0.0
        %520 = vmatprep.subr.mxu0 0.0
        %521 = vmatpush2.xpose.msra.mxu0 0.0
        %522 = vmatprep.subr.mxu0 0.0
        %523 = vmatpush2.xpose.msra.mxu0 0.0
        %524 = vmatprep.subr.mxu0 0.0
        %525 = vmatpush2.xpose.msra.mxu0 0.0
        %526 = vmatprep.subr.mxu0 0.0
        %527 = vmatpush2.xpose.msra.mxu0 0.0
        %528 = vmatprep.subr.mxu0 0.0
        %529 = vmatpush2.xpose.msra.mxu0 0.0
        %530 = vmatprep.subr.mxu0 0.0
        %531 = vmatpush2.xpose.msra.mxu0 0.0
        %532 = vmatprep.subr.mxu0 0.0
        %533 = vmatpush2.xpose.msra.mxu0 0.0
        %534 = vmatprep.subr.mxu0 0.0
        %535 = vmatpush2.xpose.msra.mxu0 0.0
        %536 = vmatprep.subr.mxu0 0.0
        %537 = vmatpush2.xpose.msra.mxu0 0.0
        %538 = vmatprep.subr.mxu0 0.0
        %539 = vmatpush2.xpose.msra.mxu0 0.0
        %540 = vmatprep.subr.mxu0 0.0
        %541 = vmatpush2.xpose.msra.mxu0 0.0
        %542 = vmatprep.subr.mxu0 0.0
        %543 = vmatpush2.xpose.msra.mxu0 0.0
        %544 = vmatprep.subr.mxu0 0.0
        %545 = vmatpush2.xpose.msra.mxu0 0.0
        %546 = vmatprep.mubr.f32.mxu0 0.0
        %547 = vmatmul.mubr.f32.gmra.mxu0 %v450
        %v548 = vpop.f32.mrf.mxu0
        %v549 = vadd.f32 0.0, %v548
        %v550 = vpop.f32.mrf.mxu0
        %551 = vmatprep.mubr.f32.mxu0 0.0
        %552 = vmatmul.mubr.f32.gmra.mxu0 %v451
        %v553 = vpop.f32.mrf.mxu0
        %v554 = vadd.f32 0.0, %v553
        %v555 = vpop.f32.mrf.mxu0
        %556 = vmatprep.mubr.f32.mxu0 0.0
        %557 = vmatmul.mubr.f32.gmra.mxu0 %v452
        %v558 = vpop.f32.mrf.mxu0
        %v559 = vadd.f32 0.0, %v558
        %v560 = vpop.f32.mrf.mxu0
        %561 = vmatprep.mubr.f32.mxu0 0.0
        %562 = vmatmul.mubr.f32.gmra.mxu0 %v453
        %v563 = vpop.f32.mrf.mxu0
        %v564 = vadd.f32 0.0, %v563
        %v565 = vpop.f32.mrf.mxu0
        %566 = vmatprep.mubr.f32.mxu0 0.0
        %567 = vmatmul.mubr.f32.gmra.mxu0 %v454
        %v568 = vpop.f32.mrf.mxu0
        %v569 = vadd.f32 0.0, %v568
        %v570 = vpop.f32.mrf.mxu0
        %571 = vmatprep.mubr.f32.mxu0 0.0
        %572 = vmatmul.mubr.f32.gmra.mxu0 %v455
        %v573 = vpop.f32.mrf.mxu0
        %v574 = vadd.f32 0.0, %v573
        %v575 = vpop.f32.mrf.mxu0
        %576 = vmatprep.mubr.f32.mxu0 0.0
        %577 = vmatmul.mubr.f32.gmra.mxu0 %v456
        %v578 = vpop.f32.mrf.mxu0
        %v579 = vadd.f32 0.0, %v578
        %v580 = vpop.f32.mrf.mxu0
        %581 = vmatprep.mubr.f32.mxu0 0.0
        %582 = vmatmul.mubr.f32.gmra.mxu0 %v457
        %v583 = vpop.f32.mrf.mxu0
        %v584 = vadd.f32 0.0, %v583
        %v585 = vpop.f32.mrf.mxu0
        %586 = vmatprep.mubr.f32.mxu0 0.0
        %587 = vmatmul.mubr.f32.gmra.mxu0 %v458
        %v588 = vpop.f32.mrf.mxu0
        %v589 = vadd.f32 0.0, %v588
        %v590 = vpop.f32.mrf.mxu0
        %591 = vmatprep.mubr.f32.mxu0 0.0
        %592 = vmatmul.mubr.f32.gmra.mxu0 %v459
        %v593 = vpop.f32.mrf.mxu0
        %v594 = vadd.f32 0.0, %v593
        %v595 = vpop.f32.mrf.mxu0
        %596 = vmatprep.mubr.f32.mxu0 0.0
        %597 = vmatmul.mubr.f32.gmra.mxu0 %v460
        %v598 = vpop.f32.mrf.mxu0
        %v599 = vadd.f32 0.0, %v598
        %v600 = vpop.f32.mrf.mxu0
        %601 = vmatprep.mubr.f32.mxu0 0.0
        %602 = vmatmul.mubr.f32.gmra.mxu0 %v461
        %v603 = vpop.f32.mrf.mxu0
        %v604 = vadd.f32 0.0, %v603
        %v605 = vpop.f32.mrf.mxu0
        %606 = vmatprep.mubr.f32.mxu0 0.0
        %607 = vmatmul.mubr.f32.gmra.mxu0 %v462
        %v608 = vpop.f32.mrf.mxu0
        %v609 = vadd.f32 0.0, %v608
        %v610 = vpop.f32.mrf.mxu0
        %611 = vmatprep.mubr.f32.mxu0 0.0
        %612 = vmatmul.mubr.f32.gmra.mxu0 %v463
        %v613 = vpop.f32.mrf.mxu0
        %v614 = vadd.f32 0.0, %v613
        %v615 = vpop.f32.mrf.mxu0
        %616 = vmatprep.mubr.f32.mxu0 0.0
        %617 = vmatmul.mubr.f32.gmra.mxu0 %v464
        %v618 = vpop.f32.mrf.mxu0
        %v619 = vadd.f32 0.0, %v618
        %v620 = vpop.f32.mrf.mxu0
        %621 = vmatprep.mubr.f32.mxu0 0.0
        %622 = vmatmul.mubr.f32.gmra.mxu0 %v465
        %v623 = vpop.f32.mrf.mxu0
        %v624 = vadd.f32 0.0, %v623
        %v625 = vpop.f32.mrf.mxu0
        %626 = vdwg.mxu0
        %v627 = vld [vmem:[%s334] sm:$0xff]
        %v628 = vld [vmem:[%s334 + $0x8] sm:$0xff]
        %v629 = vld [vmem:[%s334 + $0x10] sm:$0xff]
        %v630 = vld [vmem:[%s334 + $0x18] sm:$0xff]
        %vm631 = vnez %v627
        %vm632 = vnez %v628
        %vm633 = vnez %v629
        %vm634 = vnez %v630
        %v635 = vsel %vm631, 16843009, 0
        %v636 = vsel %vm632, 16843009, 0
        %v637 = vsel %vm633, 16843009, 0
        %v638 = vsel %vm634, 16843009, 0
        %v639 = vunpack.c.0.s8 %v635
        %v640 = vunpack.c.1.s8 %v635
        %v641 = vunpack.c.2.s8 %v635
        %v642 = vunpack.c.3.s8 %v635
        %v643 = vunpack.c.0.s8 %v636
        %v644 = vunpack.c.1.s8 %v636
        %v645 = vunpack.c.2.s8 %v636
        %v646 = vunpack.c.3.s8 %v636
        %v647 = vunpack.c.0.s8 %v637
        %v648 = vunpack.c.1.s8 %v637
        %v649 = vunpack.c.2.s8 %v637
        %v650 = vunpack.c.3.s8 %v637
        %v651 = vunpack.c.0.s8 %v638
        %v652 = vunpack.c.1.s8 %v638
        %v653 = vunpack.c.2.s8 %v638
        %v654 = vunpack.c.3.s8 %v638
        %v655 = vpack.c.b16 %v639, %v639
        %v656 = vpack.c.b8 %v655, %v655
        %v657 = vpack.c.b16 %v640, %v640
        %v658 = vpack.c.b8 %v657, %v657
        %v659 = vpack.c.b16 %v641, %v641
        %v660 = vpack.c.b8 %v659, %v659
        %v661 = vpack.c.b16 %v642, %v642
        %v662 = vpack.c.b8 %v661, %v661
        %v663 = vpack.c.b16 %v643, %v643
        %v664 = vpack.c.b8 %v663, %v663
        %v665 = vpack.c.b16 %v644, %v644
        %v666 = vpack.c.b8 %v665, %v665
        %v667 = vpack.c.b16 %v645, %v645
        %v668 = vpack.c.b8 %v667, %v667
        %v669 = vpack.c.b16 %v646, %v646
        %v670 = vpack.c.b8 %v669, %v669
        %v671 = vpack.c.b16 %v647, %v647
        %v672 = vpack.c.b8 %v671, %v671
        %v673 = vpack.c.b16 %v648, %v648
        %v674 = vpack.c.b8 %v673, %v673
        %v675 = vpack.c.b16 %v649, %v649
        %v676 = vpack.c.b8 %v675, %v675
        %v677 = vpack.c.b16 %v650, %v650
        %v678 = vpack.c.b8 %v677, %v677
        %v679 = vpack.c.b16 %v651, %v651
        %v680 = vpack.c.b8 %v679, %v679
        %v681 = vpack.c.b16 %v652, %v652
        %v682 = vpack.c.b8 %v681, %v681
        %v683 = vpack.c.b16 %v653, %v653
        %v684 = vpack.c.b8 %v683, %v683
        %v685 = vpack.c.b16 %v654, %v654
        %v686 = vpack.c.b8 %v685, %v685
        %vm687 = vnez %v656
        %vm688 = vnez %v658
        %vm689 = vnez %v660
        %vm690 = vnez %v662
        %vm691 = vnez %v664
        %vm692 = vnez %v666
        %vm693 = vnez %v668
        %vm694 = vnez %v670
        %vm695 = vnez %v672
        %vm696 = vnez %v674
        %vm697 = vnez %v676
        %vm698 = vnez %v678
        %vm699 = vnez %v680
        %vm700 = vnez %v682
        %vm701 = vnez %v684
        %vm702 = vnez %v686
        %v703 = vsel %vm687, 16843009, 0
        %v704 = vsel %vm688, 16843009, 0
        %v705 = vsel %vm689, 16843009, 0
        %v706 = vsel %vm690, 16843009, 0
        %v707 = vsel %vm691, 16843009, 0
        %v708 = vsel %vm692, 16843009, 0
        %v709 = vsel %vm693, 16843009, 0
        %v710 = vsel %vm694, 16843009, 0
        %v711 = vsel %vm695, 16843009, 0
        %v712 = vsel %vm696, 16843009, 0
        %v713 = vsel %vm697, 16843009, 0
        %v714 = vsel %vm698, 16843009, 0
        %v715 = vsel %vm699, 16843009, 0
        %v716 = vsel %vm700, 16843009, 0
        %v717 = vsel %vm701, 16843009, 0
        %v718 = vsel %vm702, 16843009, 0
        %v719 = vunpack.c.0.s8 %v703
        %v720 = vunpack.c.0.s8 %v704
        %v721 = vunpack.c.0.s8 %v705
        %v722 = vunpack.c.0.s8 %v706
        %v723 = vunpack.c.0.s8 %v707
        %v724 = vunpack.c.0.s8 %v708
        %v725 = vunpack.c.0.s8 %v709
        %v726 = vunpack.c.0.s8 %v710
        %v727 = vunpack.c.0.s8 %v711
        %v728 = vunpack.c.0.s8 %v712
        %v729 = vunpack.c.0.s8 %v713
        %v730 = vunpack.c.0.s8 %v714
        %v731 = vunpack.c.0.s8 %v715
        %v732 = vunpack.c.0.s8 %v716
        %v733 = vunpack.c.0.s8 %v717
        %v734 = vunpack.c.0.s8 %v718
        %vm735 = vcmp.ne.s32.totalorder %v719, 0
        %vm736 = vcmp.ne.s32.totalorder %v720, 0
        %vm737 = vcmp.ne.s32.totalorder %v721, 0
        %vm738 = vcmp.ne.s32.totalorder %v722, 0
        %vm739 = vcmp.ne.s32.totalorder %v723, 0
        %vm740 = vcmp.ne.s32.totalorder %v724, 0
        %vm741 = vcmp.ne.s32.totalorder %v725, 0
        %vm742 = vcmp.ne.s32.totalorder %v726, 0
        %vm743 = vcmp.ne.s32.totalorder %v727, 0
        %vm744 = vcmp.ne.s32.totalorder %v728, 0
        %vm745 = vcmp.ne.s32.totalorder %v729, 0
        %vm746 = vcmp.ne.s32.totalorder %v730, 0
        %vm747 = vcmp.ne.s32.totalorder %v731, 0
        %vm748 = vcmp.ne.s32.totalorder %v732, 0
        %vm749 = vcmp.ne.s32.totalorder %v733, 0
        %vm750 = vcmp.ne.s32.totalorder %v734, 0
        %v751 = vsel %vm735, -1e+09, %v549
        %v752 = vsel %vm736, -1e+09, %v554
        %v753 = vsel %vm737, -1e+09, %v559
        %v754 = vsel %vm738, -1e+09, %v564
        %v755 = vsel %vm739, -1e+09, %v569
        %v756 = vsel %vm740, -1e+09, %v574
        %v757 = vsel %vm741, -1e+09, %v579
        %v758 = vsel %vm742, -1e+09, %v584
        %v759 = vsel %vm743, -1e+09, %v589
        %v760 = vsel %vm744, -1e+09, %v594
        %v761 = vsel %vm745, -1e+09, %v599
        %v762 = vsel %vm746, -1e+09, %v604
        %v763 = vsel %vm747, -1e+09, %v609
        %v764 = vsel %vm748, -1e+09, %v614
        %v765 = vsel %vm749, -1e+09, %v619
        %v766 = vsel %vm750, -1e+09, %v624
        %v767 = vld [vmem:[#allocation2] sm:$0xff]
        %v768 = vld [vmem:[#allocation2 + $0x8] sm:$0xff]
        %v769 = vld [vmem:[#allocation2 + $0x10] sm:$0xff]
        %v770 = vld [vmem:[#allocation2 + $0x18] sm:$0xff]
        %v771 = vld [vmem:[#allocation2 + $0x20] sm:$0xff]
        %v772 = vld [vmem:[#allocation2 + $0x28] sm:$0xff]
        %v773 = vld [vmem:[#allocation2 + $0x30] sm:$0xff]
        %v774 = vld [vmem:[#allocation2 + $0x38] sm:$0xff]
        %v775 = vld [vmem:[#allocation2 + $0x40] sm:$0xff]
        %v776 = vld [vmem:[#allocation2 + $0x48] sm:$0xff]
        %v777 = vld [vmem:[#allocation2 + $0x50] sm:$0xff]
        %v778 = vld [vmem:[#allocation2 + $0x58] sm:$0xff]
        %v779 = vld [vmem:[#allocation2 + $0x60] sm:$0xff]
        %v780 = vld [vmem:[#allocation2 + $0x68] sm:$0xff]
        %v781 = vld [vmem:[#allocation2 + $0x70] sm:$0xff]
        %v782 = vld [vmem:[#allocation2 + $0x78] sm:$0xff]
        %783 = vmax.xlane.f32.xlu0 %v751
        %v784 = vpop.xlane.xlu0 %783
        %785 = vmax.xlane.f32.xlu0 %v752
        %v786 = vpop.xlane.xlu0 %785
        %787 = vmax.xlane.f32.xlu0 %v753
        %v788 = vpop.xlane.xlu0 %787
        %789 = vmax.xlane.f32.xlu0 %v754
        %v790 = vpop.xlane.xlu0 %789
        %791 = vmax.xlane.f32.xlu0 %v755
        %v792 = vpop.xlane.xlu0 %791
        %793 = vmax.xlane.f32.xlu0 %v756
        %v794 = vpop.xlane.xlu0 %793
        %795 = vmax.xlane.f32.xlu0 %v757
        %v796 = vpop.xlane.xlu0 %795
        %797 = vmax.xlane.f32.xlu0 %v758
        %v798 = vpop.xlane.xlu0 %797
        %799 = vmax.xlane.f32.xlu0 %v759
        %v800 = vpop.xlane.xlu0 %799
        %801 = vmax.xlane.f32.xlu0 %v760
        %v802 = vpop.xlane.xlu0 %801
        %803 = vmax.xlane.f32.xlu0 %v761
        %v804 = vpop.xlane.xlu0 %803
        %805 = vmax.xlane.f32.xlu0 %v762
        %v806 = vpop.xlane.xlu0 %805
        %807 = vmax.xlane.f32.xlu0 %v763
        %v808 = vpop.xlane.xlu0 %807
        %809 = vmax.xlane.f32.xlu0 %v764
        %v810 = vpop.xlane.xlu0 %809
        %811 = vmax.xlane.f32.xlu0 %v765
        %v812 = vpop.xlane.xlu0 %811
        %813 = vmax.xlane.f32.xlu0 %v766
        %v814 = vpop.xlane.xlu0 %813
        %v815 = vmax.f32 %v767, %v784
        %v816 = vmax.f32 %v768, %v786
        %v817 = vmax.f32 %v769, %v788
        %v818 = vmax.f32 %v770, %v790
        %v819 = vmax.f32 %v771, %v792
        %v820 = vmax.f32 %v772, %v794
        %v821 = vmax.f32 %v773, %v796
        %v822 = vmax.f32 %v774, %v798
        %v823 = vmax.f32 %v775, %v800
        %v824 = vmax.f32 %v776, %v802
        %v825 = vmax.f32 %v777, %v804
        %v826 = vmax.f32 %v778, %v806
        %v827 = vmax.f32 %v779, %v808
        %v828 = vmax.f32 %v780, %v810
        %v829 = vmax.f32 %v781, %v812
        %v830 = vmax.f32 %v782, %v814
        %v831 = vsub.f32 %v767, %v815
        %v832 = vsub.f32 %v768, %v816
        %v833 = vsub.f32 %v769, %v817
        %v834 = vsub.f32 %v770, %v818
        %v835 = vsub.f32 %v771, %v819
        %v836 = vsub.f32 %v772, %v820
        %v837 = vsub.f32 %v773, %v821
        %v838 = vsub.f32 %v774, %v822
        %v839 = vsub.f32 %v775, %v823
        %v840 = vsub.f32 %v776, %v824
        %v841 = vsub.f32 %v777, %v825
        %v842 = vsub.f32 %v778, %v826
        %v843 = vsub.f32 %v779, %v827
        %v844 = vsub.f32 %v780, %v828
        %v845 = vsub.f32 %v781, %v829
        %v846 = vsub.f32 %v782, %v830
        %v847 = vmul.f32 %v831, 1.442695
        %v848 = vpow.pop %v847
        %v849 = vmul.f32 %v832, 1.442695
        %v850 = vpow.pop %v849
        %v851 = vmul.f32 %v833, 1.442695
        %v852 = vpow.pop %v851
        %v853 = vmul.f32 %v834, 1.442695
        %v854 = vpow.pop %v853
        %v855 = vmul.f32 %v835, 1.442695
        %v856 = vpow.pop %v855
        %v857 = vmul.f32 %v836, 1.442695
        %v858 = vpow.pop %v857
        %v859 = vmul.f32 %v837, 1.442695
        %v860 = vpow.pop %v859
        %v861 = vmul.f32 %v838, 1.442695
        %v862 = vpow.pop %v861
        %v863 = vmul.f32 %v839, 1.442695
        %v864 = vpow.pop %v863
        %v865 = vmul.f32 %v840, 1.442695
        %v866 = vpow.pop %v865
        %v867 = vmul.f32 %v841, 1.442695
        %v868 = vpow.pop %v867
        %v869 = vmul.f32 %v842, 1.442695
        %v870 = vpow.pop %v869
        %v871 = vmul.f32 %v843, 1.442695
        %v872 = vpow.pop %v871
        %v873 = vmul.f32 %v844, 1.442695
        %v874 = vpow.pop %v873
        %v875 = vmul.f32 %v845, 1.442695
        %v876 = vpow.pop %v875
        %v877 = vmul.f32 %v846, 1.442695
        %v878 = vpow.pop %v877
        %880 = vset.pattern.permute.xlu0 0
        %881 = vperm.xlu0 %880, %v815
        %v882 = vpop.permute.xlu0 %881
        %885 = vset.pattern.permute.xlu0 0
        %886 = vperm.xlu0 %885, %v816
        %v887 = vpop.permute.xlu0 %886
        %890 = vset.pattern.permute.xlu0 0
        %891 = vperm.xlu0 %890, %v817
        %v892 = vpop.permute.xlu0 %891
        %895 = vset.pattern.permute.xlu0 0
        %896 = vperm.xlu0 %895, %v818
        %v897 = vpop.permute.xlu0 %896
        %900 = vset.pattern.permute.xlu0 0
        %901 = vperm.xlu0 %900, %v819
        %v902 = vpop.permute.xlu0 %901
        %905 = vset.pattern.permute.xlu0 0
        %906 = vperm.xlu0 %905, %v820
        %v907 = vpop.permute.xlu0 %906
        %910 = vset.pattern.permute.xlu0 0
        %911 = vperm.xlu0 %910, %v821
        %v912 = vpop.permute.xlu0 %911
        %915 = vset.pattern.permute.xlu0 0
        %916 = vperm.xlu0 %915, %v822
        %v917 = vpop.permute.xlu0 %916
        %920 = vset.pattern.permute.xlu0 0
        %921 = vperm.xlu0 %920, %v823
        %v922 = vpop.permute.xlu0 %921
        %925 = vset.pattern.permute.xlu0 0
        %926 = vperm.xlu0 %925, %v824
        %v927 = vpop.permute.xlu0 %926
        %930 = vset.pattern.permute.xlu0 0
        %931 = vperm.xlu0 %930, %v825
        %v932 = vpop.permute.xlu0 %931
        %935 = vset.pattern.permute.xlu0 0
        %936 = vperm.xlu0 %935, %v826
        %v937 = vpop.permute.xlu0 %936
        %940 = vset.pattern.permute.xlu0 0
        %941 = vperm.xlu0 %940, %v827
        %v942 = vpop.permute.xlu0 %941
        %945 = vset.pattern.permute.xlu0 0
        %946 = vperm.xlu0 %945, %v828
        %v947 = vpop.permute.xlu0 %946
        %950 = vset.pattern.permute.xlu0 0
        %951 = vperm.xlu0 %950, %v829
        %v952 = vpop.permute.xlu0 %951
        %955 = vset.pattern.permute.xlu0 0
        %956 = vperm.xlu0 %955, %v830
        %v957 = vpop.permute.xlu0 %956
        %v959 = vsub.f32 %v751, %v882
        %v960 = vsub.f32 %v752, %v887
        %v961 = vsub.f32 %v753, %v892
        %v962 = vsub.f32 %v754, %v897
        %v963 = vsub.f32 %v755, %v902
        %v964 = vsub.f32 %v756, %v907
        %v965 = vsub.f32 %v757, %v912
        %v966 = vsub.f32 %v758, %v917
        %v967 = vsub.f32 %v759, %v922
        %v968 = vsub.f32 %v760, %v927
        %v969 = vsub.f32 %v761, %v932
        %v970 = vsub.f32 %v762, %v937
        %v971 = vsub.f32 %v763, %v942
        %v972 = vsub.f32 %v764, %v947
        %v973 = vsub.f32 %v765, %v952
        %v974 = vsub.f32 %v766, %v957
        %v975 = vmul.f32 %v959, 1.442695
        %v976 = vpow.pop %v975
        %v977 = vmul.f32 %v960, 1.442695
        %v978 = vpow.pop %v977
        %v979 = vmul.f32 %v961, 1.442695
        %v980 = vpow.pop %v979
        %v981 = vmul.f32 %v962, 1.442695
        %v982 = vpow.pop %v981
        %v983 = vmul.f32 %v963, 1.442695
        %v984 = vpow.pop %v983
        %v985 = vmul.f32 %v964, 1.442695
        %v986 = vpow.pop %v985
        %v987 = vmul.f32 %v965, 1.442695
        %v988 = vpow.pop %v987
        %v989 = vmul.f32 %v966, 1.442695
        %v990 = vpow.pop %v989
        %v991 = vmul.f32 %v967, 1.442695
        %v992 = vpow.pop %v991
        %v993 = vmul.f32 %v968, 1.442695
        %v994 = vpow.pop %v993
        %v995 = vmul.f32 %v969, 1.442695
        %v996 = vpow.pop %v995
        %v997 = vmul.f32 %v970, 1.442695
        %v998 = vpow.pop %v997
        %v999 = vmul.f32 %v971, 1.442695
        %v1000 = vpow.pop %v999
        %v1001 = vmul.f32 %v972, 1.442695
        %v1002 = vpow.pop %v1001
        %v1003 = vmul.f32 %v973, 1.442695
        %v1004 = vpow.pop %v1003
        %v1005 = vmul.f32 %v974, 1.442695
        %v1006 = vpow.pop %v1005
        %v1007 = vld [vmem:[#allocation3] sm:$0xff]
        %v1008 = vld [vmem:[#allocation3 + $0x8] sm:$0xff]
        %v1009 = vld [vmem:[#allocation3 + $0x10] sm:$0xff]
        %v1010 = vld [vmem:[#allocation3 + $0x18] sm:$0xff]
        %v1011 = vld [vmem:[#allocation3 + $0x20] sm:$0xff]
        %v1012 = vld [vmem:[#allocation3 + $0x28] sm:$0xff]
        %v1013 = vld [vmem:[#allocation3 + $0x30] sm:$0xff]
        %v1014 = vld [vmem:[#allocation3 + $0x38] sm:$0xff]
        %v1015 = vld [vmem:[#allocation3 + $0x40] sm:$0xff]
        %v1016 = vld [vmem:[#allocation3 + $0x48] sm:$0xff]
        %v1017 = vld [vmem:[#allocation3 + $0x50] sm:$0xff]
        %v1018 = vld [vmem:[#allocation3 + $0x58] sm:$0xff]
        %v1019 = vld [vmem:[#allocation3 + $0x60] sm:$0xff]
        %v1020 = vld [vmem:[#allocation3 + $0x68] sm:$0xff]
        %v1021 = vld [vmem:[#allocation3 + $0x70] sm:$0xff]
        %v1022 = vld [vmem:[#allocation3 + $0x78] sm:$0xff]
        %v1023 = vmul.f32 %v848, %v1007
        %v1024 = vmul.f32 %v850, %v1008
        %v1025 = vmul.f32 %v852, %v1009
        %v1026 = vmul.f32 %v854, %v1010
        %v1027 = vmul.f32 %v856, %v1011
        %v1028 = vmul.f32 %v858, %v1012
        %v1029 = vmul.f32 %v860, %v1013
        %v1030 = vmul.f32 %v862, %v1014
        %v1031 = vmul.f32 %v864, %v1015
        %v1032 = vmul.f32 %v866, %v1016
        %v1033 = vmul.f32 %v868, %v1017
        %v1034 = vmul.f32 %v870, %v1018
        %v1035 = vmul.f32 %v872, %v1019
        %v1036 = vmul.f32 %v874, %v1020
        %v1037 = vmul.f32 %v876, %v1021
        %v1038 = vmul.f32 %v878, %v1022
        %1039 = vadd.xlane.f32.xlu0 %v976
        %v1040 = vpop.xlane.xlu0 %1039
        %1041 = vadd.xlane.f32.xlu0 %v978
        %v1042 = vpop.xlane.xlu0 %1041
        %1043 = vadd.xlane.f32.xlu0 %v980
        %v1044 = vpop.xlane.xlu0 %1043
        %1045 = vadd.xlane.f32.xlu0 %v982
        %v1046 = vpop.xlane.xlu0 %1045
        %1047 = vadd.xlane.f32.xlu0 %v984
        %v1048 = vpop.xlane.xlu0 %1047
        %1049 = vadd.xlane.f32.xlu0 %v986
        %v1050 = vpop.xlane.xlu0 %1049
        %1051 = vadd.xlane.f32.xlu0 %v988
        %v1052 = vpop.xlane.xlu0 %1051
        %1053 = vadd.xlane.f32.xlu0 %v990
        %v1054 = vpop.xlane.xlu0 %1053
        %1055 = vadd.xlane.f32.xlu0 %v992
        %v1056 = vpop.xlane.xlu0 %1055
        %1057 = vadd.xlane.f32.xlu0 %v994
        %v1058 = vpop.xlane.xlu0 %1057
        %1059 = vadd.xlane.f32.xlu0 %v996
        %v1060 = vpop.xlane.xlu0 %1059
        %1061 = vadd.xlane.f32.xlu0 %v998
        %v1062 = vpop.xlane.xlu0 %1061
        %1063 = vadd.xlane.f32.xlu0 %v1000
        %v1064 = vpop.xlane.xlu0 %1063
        %1065 = vadd.xlane.f32.xlu0 %v1002
        %v1066 = vpop.xlane.xlu0 %1065
        %1067 = vadd.xlane.f32.xlu0 %v1004
        %v1068 = vpop.xlane.xlu0 %1067
        %1069 = vadd.xlane.f32.xlu0 %v1006
        %v1070 = vpop.xlane.xlu0 %1069
        %v1071 = vadd.f32 %v1023, %v1040
        %v1072 = vadd.f32 %v1024, %v1042
        %v1073 = vadd.f32 %v1025, %v1044
        %v1074 = vadd.f32 %v1026, %v1046
        %v1075 = vadd.f32 %v1027, %v1048
        %v1076 = vadd.f32 %v1028, %v1050
        %v1077 = vadd.f32 %v1029, %v1052
        %v1078 = vadd.f32 %v1030, %v1054
        %v1079 = vadd.f32 %v1031, %v1056
        %v1080 = vadd.f32 %v1032, %v1058
        %v1081 = vadd.f32 %v1033, %v1060
        %v1082 = vadd.f32 %v1034, %v1062
        %v1083 = vadd.f32 %v1035, %v1064
        %v1084 = vadd.f32 %v1036, %v1066
        %v1085 = vadd.f32 %v1037, %v1068
        %v1086 = vadd.f32 %v1038, %v1070
        %vm1087 = vcmask 7168
        %1088 = vst.msk [vmem:[#allocation3] sm:$0xff] %vm1087, %v1071
        %1089 = vst.msk [vmem:[#allocation3 + $0x8] sm:$0xff] %vm1087, %v1072
        %1090 = vst.msk [vmem:[#allocation3 + $0x10] sm:$0xff] %vm1087, %v1073
        %1091 = vst.msk [vmem:[#allocation3 + $0x18] sm:$0xff] %vm1087, %v1074
        %1092 = vst.msk [vmem:[#allocation3 + $0x20] sm:$0xff] %vm1087, %v1075
        %1093 = vst.msk [vmem:[#allocation3 + $0x28] sm:$0xff] %vm1087, %v1076
        %1094 = vst.msk [vmem:[#allocation3 + $0x30] sm:$0xff] %vm1087, %v1077
        %1095 = vst.msk [vmem:[#allocation3 + $0x38] sm:$0xff] %vm1087, %v1078
        %1096 = vst.msk [vmem:[#allocation3 + $0x40] sm:$0xff] %vm1087, %v1079
        %1097 = vst.msk [vmem:[#allocation3 + $0x48] sm:$0xff] %vm1087, %v1080
        %1098 = vst.msk [vmem:[#allocation3 + $0x50] sm:$0xff] %vm1087, %v1081
        %1099 = vst.msk [vmem:[#allocation3 + $0x58] sm:$0xff] %vm1087, %v1082
        %1100 = vst.msk [vmem:[#allocation3 + $0x60] sm:$0xff] %vm1087, %v1083
        %1101 = vst.msk [vmem:[#allocation3 + $0x68] sm:$0xff] %vm1087, %v1084
        %1102 = vst.msk [vmem:[#allocation3 + $0x70] sm:$0xff] %vm1087, %v1085
        %1103 = vst.msk [vmem:[#allocation3 + $0x78] sm:$0xff] %vm1087, %v1086
        %v1104 = vld [vmem:[#allocation4] sm:$0xff]
        %v1105 = vld [vmem:[#allocation4 + $0x8] sm:$0xff]
        %v1106 = vld [vmem:[#allocation4 + $0x10] sm:$0xff]
        %v1107 = vld [vmem:[#allocation4 + $0x18] sm:$0xff]
        %v1108 = vld [vmem:[#allocation4 + $0x20] sm:$0xff]
        %v1109 = vld [vmem:[#allocation4 + $0x28] sm:$0xff]
        %v1110 = vld [vmem:[#allocation4 + $0x30] sm:$0xff]
        %v1111 = vld [vmem:[#allocation4 + $0x38] sm:$0xff]
        %v1112 = vld [vmem:[#allocation4 + $0x40] sm:$0xff]
        %v1113 = vld [vmem:[#allocation4 + $0x48] sm:$0xff]
        %v1114 = vld [vmem:[#allocation4 + $0x50] sm:$0xff]
        %v1115 = vld [vmem:[#allocation4 + $0x58] sm:$0xff]
        %v1116 = vld [vmem:[#allocation4 + $0x60] sm:$0xff]
        %v1117 = vld [vmem:[#allocation4 + $0x68] sm:$0xff]
        %v1118 = vld [vmem:[#allocation4 + $0x70] sm:$0xff]
        %v1119 = vld [vmem:[#allocation4 + $0x78] sm:$0xff]
        %1121 = vset.pattern.permute.xlu0 0
        %1122 = vperm.xlu0 %1121, %v848
        %v1123 = vpop.permute.xlu0 %1122
        %1126 = vset.pattern.permute.xlu0 0
        %1127 = vperm.xlu0 %1126, %v850
        %v1128 = vpop.permute.xlu0 %1127
        %1131 = vset.pattern.permute.xlu0 0
        %1132 = vperm.xlu0 %1131, %v852
        %v1133 = vpop.permute.xlu0 %1132
        %1136 = vset.pattern.permute.xlu0 0
        %1137 = vperm.xlu0 %1136, %v854
        %v1138 = vpop.permute.xlu0 %1137
        %1141 = vset.pattern.permute.xlu0 0
        %1142 = vperm.xlu0 %1141, %v856
        %v1143 = vpop.permute.xlu0 %1142
        %1146 = vset.pattern.permute.xlu0 0
        %1147 = vperm.xlu0 %1146, %v858
        %v1148 = vpop.permute.xlu0 %1147
        %1151 = vset.pattern.permute.xlu0 0
        %1152 = vperm.xlu0 %1151, %v860
        %v1153 = vpop.permute.xlu0 %1152
        %1156 = vset.pattern.permute.xlu0 0
        %1157 = vperm.xlu0 %1156, %v862
        %v1158 = vpop.permute.xlu0 %1157
        %1161 = vset.pattern.permute.xlu0 0
        %1162 = vperm.xlu0 %1161, %v864
        %v1163 = vpop.permute.xlu0 %1162
        %1166 = vset.pattern.permute.xlu0 0
        %1167 = vperm.xlu0 %1166, %v866
        %v1168 = vpop.permute.xlu0 %1167
        %1171 = vset.pattern.permute.xlu0 0
        %1172 = vperm.xlu0 %1171, %v868
        %v1173 = vpop.permute.xlu0 %1172
        %1176 = vset.pattern.permute.xlu0 0
        %1177 = vperm.xlu0 %1176, %v870
        %v1178 = vpop.permute.xlu0 %1177
        %1181 = vset.pattern.permute.xlu0 0
        %1182 = vperm.xlu0 %1181, %v872
        %v1183 = vpop.permute.xlu0 %1182
        %1186 = vset.pattern.permute.xlu0 0
        %1187 = vperm.xlu0 %1186, %v874
        %v1188 = vpop.permute.xlu0 %1187
        %1191 = vset.pattern.permute.xlu0 0
        %1192 = vperm.xlu0 %1191, %v876
        %v1193 = vpop.permute.xlu0 %1192
        %1196 = vset.pattern.permute.xlu0 0
        %1197 = vperm.xlu0 %1196, %v878
        %v1198 = vpop.permute.xlu0 %1197
        %v1200 = vmul.f32 %v1123, %v1104
        %v1201 = vmul.f32 %v1128, %v1105
        %v1202 = vmul.f32 %v1133, %v1106
        %v1203 = vmul.f32 %v1138, %v1107
        %v1204 = vmul.f32 %v1143, %v1108
        %v1205 = vmul.f32 %v1148, %v1109
        %v1206 = vmul.f32 %v1153, %v1110
        %v1207 = vmul.f32 %v1158, %v1111
        %v1208 = vmul.f32 %v1163, %v1112
        %v1209 = vmul.f32 %v1168, %v1113
        %v1210 = vmul.f32 %v1173, %v1114
        %v1211 = vmul.f32 %v1178, %v1115
        %v1212 = vmul.f32 %v1183, %v1116
        %v1213 = vmul.f32 %v1188, %v1117
        %v1214 = vmul.f32 %v1193, %v1118
        %v1215 = vmul.f32 %v1198, %v1119
        %v1216 = vld [vmem:[%s325] sm:$0xff]
        %v1217 = vld [vmem:[%s325 + $0x8] sm:$0xff]
        %v1218 = vld [vmem:[%s325 + $0x10] sm:$0xff]
        %v1219 = vld [vmem:[%s325 + $0x18] sm:$0xff]
        %v1220 = vld [vmem:[%s325 + $0x20] sm:$0xff]
        %v1221 = vld [vmem:[%s325 + $0x28] sm:$0xff]
        %v1222 = vld [vmem:[%s325 + $0x30] sm:$0xff]
        %v1223 = vld [vmem:[%s325 + $0x38] sm:$0xff]
        %v1224 = vld [vmem:[%s325 + $0x40] sm:$0xff]
        %v1225 = vld [vmem:[%s325 + $0x48] sm:$0xff]
        %v1226 = vld [vmem:[%s325 + $0x50] sm:$0xff]
        %v1227 = vld [vmem:[%s325 + $0x58] sm:$0xff]
        %v1228 = vld [vmem:[%s325 + $0x60] sm:$0xff]
        %v1229 = vld [vmem:[%s325 + $0x68] sm:$0xff]
        %v1230 = vld [vmem:[%s325 + $0x70] sm:$0xff]
        %v1231 = vld [vmem:[%s325 + $0x78] sm:$0xff]
        %1232 = vmatprep.subr.mxu0 0.0
        %1233 = vmatpush1.msra.mxu0 %v1231
        %1234 = vmatprep.subr.mxu0 0.0
        %1235 = vmatpush1.msra.mxu0 %v1230
        %1236 = vmatprep.subr.mxu0 0.0
        %1237 = vmatpush1.msra.mxu0 %v1229
        %1238 = vmatprep.subr.mxu0 0.0
        %1239 = vmatpush1.msra.mxu0 %v1228
        %1240 = vmatprep.subr.mxu0 0.0
        %1241 = vmatpush1.msra.mxu0 %v1227
        %1242 = vmatprep.subr.mxu0 0.0
        %1243 = vmatpush1.msra.mxu0 %v1226
        %1244 = vmatprep.subr.mxu0 0.0
        %1245 = vmatpush1.msra.mxu0 %v1225
        %1246 = vmatprep.subr.mxu0 0.0
        %1247 = vmatpush1.msra.mxu0 %v1224
        %1248 = vmatprep.subr.mxu0 0.0
        %1249 = vmatpush1.msra.mxu0 %v1223
        %1250 = vmatprep.subr.mxu0 0.0
        %1251 = vmatpush1.msra.mxu0 %v1222
        %1252 = vmatprep.subr.mxu0 0.0
        %1253 = vmatpush1.msra.mxu0 %v1221
        %1254 = vmatprep.subr.mxu0 0.0
        %1255 = vmatpush1.msra.mxu0 %v1220
        %1256 = vmatprep.subr.mxu0 0.0
        %1257 = vmatpush1.msra.mxu0 %v1219
        %1258 = vmatprep.subr.mxu0 0.0
        %1259 = vmatpush1.msra.mxu0 %v1218
        %1260 = vmatprep.subr.mxu0 0.0
        %1261 = vmatpush1.msra.mxu0 %v1217
        %1262 = vmatprep.subr.mxu0 0.0
        %1263 = vmatpush1.msra.mxu0 %v1216
        %1264 = vmatprep.subr.mxu0 0.0
        %1265 = vmatpush2.msra.mxu0 0.0
        %1266 = vmatprep.subr.mxu0 0.0
        %1267 = vmatpush2.msra.mxu0 0.0
        %1268 = vmatprep.subr.mxu0 0.0
        %1269 = vmatpush2.msra.mxu0 0.0
        %1270 = vmatprep.subr.mxu0 0.0
        %1271 = vmatpush2.msra.mxu0 0.0
        %1272 = vmatprep.subr.mxu0 0.0
        %1273 = vmatpush2.msra.mxu0 0.0
        %1274 = vmatprep.subr.mxu0 0.0
        %1275 = vmatpush2.msra.mxu0 0.0
        %1276 = vmatprep.subr.mxu0 0.0
        %1277 = vmatpush2.msra.mxu0 0.0
        %1278 = vmatprep.subr.mxu0 0.0
        %1279 = vmatpush2.msra.mxu0 0.0
        %1280 = vmatprep.subr.mxu0 0.0
        %1281 = vmatpush2.msra.mxu0 0.0
        %1282 = vmatprep.subr.mxu0 0.0
        %1283 = vmatpush2.msra.mxu0 0.0
        %1284 = vmatprep.subr.mxu0 0.0
        %1285 = vmatpush2.msra.mxu0 0.0
        %1286 = vmatprep.subr.mxu0 0.0
        %1287 = vmatpush2.msra.mxu0 0.0
        %1288 = vmatprep.subr.mxu0 0.0
        %1289 = vmatpush2.msra.mxu0 0.0
        %1290 = vmatprep.subr.mxu0 0.0
        %1291 = vmatpush2.msra.mxu0 0.0
        %1292 = vmatprep.subr.mxu0 0.0
        %1293 = vmatpush2.msra.mxu0 0.0
        %1294 = vmatprep.subr.mxu0 0.0
        %1295 = vmatpush2.msra.mxu0 0.0
        %1296 = vmatprep.mubr.f32.mxu0 0.0
        %1297 = vmatmul.mubr.f32.gmra.mxu0 %v976
        %v1298 = vpop.f32.mrf.mxu0
        %v1299 = vadd.f32 0.0, %v1298
        %v1300 = vpop.f32.mrf.mxu0
        %1301 = vmatprep.mubr.f32.mxu0 0.0
        %1302 = vmatmul.mubr.f32.gmra.mxu0 %v978
        %v1303 = vpop.f32.mrf.mxu0
        %v1304 = vadd.f32 0.0, %v1303
        %v1305 = vpop.f32.mrf.mxu0
        %1306 = vmatprep.mubr.f32.mxu0 0.0
        %1307 = vmatmul.mubr.f32.gmra.mxu0 %v980
        %v1308 = vpop.f32.mrf.mxu0
        %v1309 = vadd.f32 0.0, %v1308
        %v1310 = vpop.f32.mrf.mxu0
        %1311 = vmatprep.mubr.f32.mxu0 0.0
        %1312 = vmatmul.mubr.f32.gmra.mxu0 %v982
        %v1313 = vpop.f32.mrf.mxu0
        %v1314 = vadd.f32 0.0, %v1313
        %v1315 = vpop.f32.mrf.mxu0
        %1316 = vmatprep.mubr.f32.mxu0 0.0
        %1317 = vmatmul.mubr.f32.gmra.mxu0 %v984
        %v1318 = vpop.f32.mrf.mxu0
        %v1319 = vadd.f32 0.0, %v1318
        %v1320 = vpop.f32.mrf.mxu0
        %1321 = vmatprep.mubr.f32.mxu0 0.0
        %1322 = vmatmul.mubr.f32.gmra.mxu0 %v986
        %v1323 = vpop.f32.mrf.mxu0
        %v1324 = vadd.f32 0.0, %v1323
        %v1325 = vpop.f32.mrf.mxu0
        %1326 = vmatprep.mubr.f32.mxu0 0.0
        %1327 = vmatmul.mubr.f32.gmra.mxu0 %v988
        %v1328 = vpop.f32.mrf.mxu0
        %v1329 = vadd.f32 0.0, %v1328
        %v1330 = vpop.f32.mrf.mxu0
        %1331 = vmatprep.mubr.f32.mxu0 0.0
        %1332 = vmatmul.mubr.f32.gmra.mxu0 %v990
        %v1333 = vpop.f32.mrf.mxu0
        %v1334 = vadd.f32 0.0, %v1333
        %v1335 = vpop.f32.mrf.mxu0
        %1336 = vmatprep.mubr.f32.mxu0 0.0
        %1337 = vmatmul.mubr.f32.gmra.mxu0 %v992
        %v1338 = vpop.f32.mrf.mxu0
        %v1339 = vadd.f32 0.0, %v1338
        %v1340 = vpop.f32.mrf.mxu0
        %1341 = vmatprep.mubr.f32.mxu0 0.0
        %1342 = vmatmul.mubr.f32.gmra.mxu0 %v994
        %v1343 = vpop.f32.mrf.mxu0
        %v1344 = vadd.f32 0.0, %v1343
        %v1345 = vpop.f32.mrf.mxu0
        %1346 = vmatprep.mubr.f32.mxu0 0.0
        %1347 = vmatmul.mubr.f32.gmra.mxu0 %v996
        %v1348 = vpop.f32.mrf.mxu0
        %v1349 = vadd.f32 0.0, %v1348
        %v1350 = vpop.f32.mrf.mxu0
        %1351 = vmatprep.mubr.f32.mxu0 0.0
        %1352 = vmatmul.mubr.f32.gmra.mxu0 %v998
        %v1353 = vpop.f32.mrf.mxu0
        %v1354 = vadd.f32 0.0, %v1353
        %v1355 = vpop.f32.mrf.mxu0
        %1356 = vmatprep.mubr.f32.mxu0 0.0
        %1357 = vmatmul.mubr.f32.gmra.mxu0 %v1000
        %v1358 = vpop.f32.mrf.mxu0
        %v1359 = vadd.f32 0.0, %v1358
        %v1360 = vpop.f32.mrf.mxu0
        %1361 = vmatprep.mubr.f32.mxu0 0.0
        %1362 = vmatmul.mubr.f32.gmra.mxu0 %v1002
        %v1363 = vpop.f32.mrf.mxu0
        %v1364 = vadd.f32 0.0, %v1363
        %v1365 = vpop.f32.mrf.mxu0
        %1366 = vmatprep.mubr.f32.mxu0 0.0
        %1367 = vmatmul.mubr.f32.gmra.mxu0 %v1004
        %v1368 = vpop.f32.mrf.mxu0
        %v1369 = vadd.f32 0.0, %v1368
        %v1370 = vpop.f32.mrf.mxu0
        %1371 = vmatprep.mubr.f32.mxu0 0.0
        %1372 = vmatmul.mubr.f32.gmra.mxu0 %v1006
        %v1373 = vpop.f32.mrf.mxu0
        %v1374 = vadd.f32 0.0, %v1373
        %v1375 = vpop.f32.mrf.mxu0
        %1376 = vdwg.mxu0
        %v1377 = vadd.f32 %v1200, %v1299
        %v1378 = vadd.f32 %v1201, %v1304
        %v1379 = vadd.f32 %v1202, %v1309
        %v1380 = vadd.f32 %v1203, %v1314
        %v1381 = vadd.f32 %v1204, %v1319
        %v1382 = vadd.f32 %v1205, %v1324
        %v1383 = vadd.f32 %v1206, %v1329
        %v1384 = vadd.f32 %v1207, %v1334
        %v1385 = vadd.f32 %v1208, %v1339
        %v1386 = vadd.f32 %v1209, %v1344
        %v1387 = vadd.f32 %v1210, %v1349
        %v1388 = vadd.f32 %v1211, %v1354
        %v1389 = vadd.f32 %v1212, %v1359
        %v1390 = vadd.f32 %v1213, %v1364
        %v1391 = vadd.f32 %v1214, %v1369
        %v1392 = vadd.f32 %v1215, %v1374
        %1393 = vst [vmem:[#allocation4] sm:$0xff] %v1377
        %1394 = vst [vmem:[#allocation4 + $0x8] sm:$0xff] %v1378
        %1395 = vst [vmem:[#allocation4 + $0x10] sm:$0xff] %v1379
        %1396 = vst [vmem:[#allocation4 + $0x18] sm:$0xff] %v1380
        %1397 = vst [vmem:[#allocation4 + $0x20] sm:$0xff] %v1381
        %1398 = vst [vmem:[#allocation4 + $0x28] sm:$0xff] %v1382
        %1399 = vst [vmem:[#allocation4 + $0x30] sm:$0xff] %v1383
        %1400 = vst [vmem:[#allocation4 + $0x38] sm:$0xff] %v1384
        %1401 = vst [vmem:[#allocation4 + $0x40] sm:$0xff] %v1385
        %1402 = vst [vmem:[#allocation4 + $0x48] sm:$0xff] %v1386
        %1403 = vst [vmem:[#allocation4 + $0x50] sm:$0xff] %v1387
        %1404 = vst [vmem:[#allocation4 + $0x58] sm:$0xff] %v1388
        %1405 = vst [vmem:[#allocation4 + $0x60] sm:$0xff] %v1389
        %1406 = vst [vmem:[#allocation4 + $0x68] sm:$0xff] %v1390
        %1407 = vst [vmem:[#allocation4 + $0x70] sm:$0xff] %v1391
        %1408 = vst [vmem:[#allocation4 + $0x78] sm:$0xff] %v1392
        %1409 = vst.msk [vmem:[#allocation2] sm:$0xff] %vm1087, %v815
        %1410 = vst.msk [vmem:[#allocation2 + $0x8] sm:$0xff] %vm1087, %v816
        %1411 = vst.msk [vmem:[#allocation2 + $0x10] sm:$0xff] %vm1087, %v817
        %1412 = vst.msk [vmem:[#allocation2 + $0x18] sm:$0xff] %vm1087, %v818
        %1413 = vst.msk [vmem:[#allocation2 + $0x20] sm:$0xff] %vm1087, %v819
        %1414 = vst.msk [vmem:[#allocation2 + $0x28] sm:$0xff] %vm1087, %v820
        %1415 = vst.msk [vmem:[#allocation2 + $0x30] sm:$0xff] %vm1087, %v821
        %1416 = vst.msk [vmem:[#allocation2 + $0x38] sm:$0xff] %vm1087, %v822
        %1417 = vst.msk [vmem:[#allocation2 + $0x40] sm:$0xff] %vm1087, %v823
        %1418 = vst.msk [vmem:[#allocation2 + $0x48] sm:$0xff] %vm1087, %v824
        %1419 = vst.msk [vmem:[#allocation2 + $0x50] sm:$0xff] %vm1087, %v825
        %1420 = vst.msk [vmem:[#allocation2 + $0x58] sm:$0xff] %vm1087, %v826
        %1421 = vst.msk [vmem:[#allocation2 + $0x60] sm:$0xff] %vm1087, %v827
        %1422 = vst.msk [vmem:[#allocation2 + $0x68] sm:$0xff] %vm1087, %v828
        %1423 = vst.msk [vmem:[#allocation2 + $0x70] sm:$0xff] %vm1087, %v829
        %1424 = vst.msk [vmem:[#allocation2 + $0x78] sm:$0xff] %vm1087, %v830
        %p1425 = scmp.eq.s32.totalorder %s34, 1
        // Predicated region
        $region57: #{tpu_custom_call.1} parent=35 // pred_check
          %p1426 = pneg %p1425
        $region58: #{tpu_custom_call.1} parent=35 // pred_check_branch
          %1428 = sbr.rel (%p1426) target = $region60
        $region59: #{tpu_custom_call.1} parent=35 // pred_region
          %v1429 = vld [vmem:[#allocation3] sm:$0xff]
          %v1430 = vld [vmem:[#allocation3 + $0x8] sm:$0xff]
          %v1431 = vld [vmem:[#allocation3 + $0x10] sm:$0xff]
          %v1432 = vld [vmem:[#allocation3 + $0x18] sm:$0xff]
          %v1433 = vld [vmem:[#allocation3 + $0x20] sm:$0xff]
          %v1434 = vld [vmem:[#allocation3 + $0x28] sm:$0xff]
          %v1435 = vld [vmem:[#allocation3 + $0x30] sm:$0xff]
          %v1436 = vld [vmem:[#allocation3 + $0x38] sm:$0xff]
          %v1437 = vld [vmem:[#allocation3 + $0x40] sm:$0xff]
          %v1438 = vld [vmem:[#allocation3 + $0x48] sm:$0xff]
          %v1439 = vld [vmem:[#allocation3 + $0x50] sm:$0xff]
          %v1440 = vld [vmem:[#allocation3 + $0x58] sm:$0xff]
          %v1441 = vld [vmem:[#allocation3 + $0x60] sm:$0xff]
          %v1442 = vld [vmem:[#allocation3 + $0x68] sm:$0xff]
          %v1443 = vld [vmem:[#allocation3 + $0x70] sm:$0xff]
          %v1444 = vld [vmem:[#allocation3 + $0x78] sm:$0xff]
          %v1445 = vrcp.pop %v1429
          %v1446 = vrcp.pop %v1430
          %v1447 = vrcp.pop %v1431
          %v1448 = vrcp.pop %v1432
          %v1449 = vrcp.pop %v1433
          %v1450 = vrcp.pop %v1434
          %v1451 = vrcp.pop %v1435
          %v1452 = vrcp.pop %v1436
          %v1453 = vrcp.pop %v1437
          %v1454 = vrcp.pop %v1438
          %v1455 = vrcp.pop %v1439
          %v1456 = vrcp.pop %v1440
          %v1457 = vrcp.pop %v1441
          %v1458 = vrcp.pop %v1442
          %v1459 = vrcp.pop %v1443
          %v1460 = vrcp.pop %v1444
          %v1461 = vld [vmem:[#allocation4] sm:$0xff]
          %v1462 = vld [vmem:[#allocation4 + $0x8] sm:$0xff]
          %v1463 = vld [vmem:[#allocation4 + $0x10] sm:$0xff]
          %v1464 = vld [vmem:[#allocation4 + $0x18] sm:$0xff]
          %v1465 = vld [vmem:[#allocation4 + $0x20] sm:$0xff]
          %v1466 = vld [vmem:[#allocation4 + $0x28] sm:$0xff]
          %v1467 = vld [vmem:[#allocation4 + $0x30] sm:$0xff]
          %v1468 = vld [vmem:[#allocation4 + $0x38] sm:$0xff]
          %v1469 = vld [vmem:[#allocation4 + $0x40] sm:$0xff]
          %v1470 = vld [vmem:[#allocation4 + $0x48] sm:$0xff]
          %v1471 = vld [vmem:[#allocation4 + $0x50] sm:$0xff]
          %v1472 = vld [vmem:[#allocation4 + $0x58] sm:$0xff]
          %v1473 = vld [vmem:[#allocation4 + $0x60] sm:$0xff]
          %v1474 = vld [vmem:[#allocation4 + $0x68] sm:$0xff]
          %v1475 = vld [vmem:[#allocation4 + $0x70] sm:$0xff]
          %v1476 = vld [vmem:[#allocation4 + $0x78] sm:$0xff]
          %1478 = vset.pattern.permute.xlu0 0
          %1479 = vperm.xlu0 %1478, %v1445
          %v1480 = vpop.permute.xlu0 %1479
          %1483 = vset.pattern.permute.xlu0 0
          %1484 = vperm.xlu0 %1483, %v1446
          %v1485 = vpop.permute.xlu0 %1484
          %1488 = vset.pattern.permute.xlu0 0
          %1489 = vperm.xlu0 %1488, %v1447
          %v1490 = vpop.permute.xlu0 %1489
          %1493 = vset.pattern.permute.xlu0 0
          %1494 = vperm.xlu0 %1493, %v1448
          %v1495 = vpop.permute.xlu0 %1494
          %1498 = vset.pattern.permute.xlu0 0
          %1499 = vperm.xlu0 %1498, %v1449
          %v1500 = vpop.permute.xlu0 %1499
          %1503 = vset.pattern.permute.xlu0 0
          %1504 = vperm.xlu0 %1503, %v1450
          %v1505 = vpop.permute.xlu0 %1504
          %1508 = vset.pattern.permute.xlu0 0
          %1509 = vperm.xlu0 %1508, %v1451
          %v1510 = vpop.permute.xlu0 %1509
          %1513 = vset.pattern.permute.xlu0 0
          %1514 = vperm.xlu0 %1513, %v1452
          %v1515 = vpop.permute.xlu0 %1514
          %1518 = vset.pattern.permute.xlu0 0
          %1519 = vperm.xlu0 %1518, %v1453
          %v1520 = vpop.permute.xlu0 %1519
          %1523 = vset.pattern.permute.xlu0 0
          %1524 = vperm.xlu0 %1523, %v1454
          %v1525 = vpop.permute.xlu0 %1524
          %1528 = vset.pattern.permute.xlu0 0
          %1529 = vperm.xlu0 %1528, %v1455
          %v1530 = vpop.permute.xlu0 %1529
          %1533 = vset.pattern.permute.xlu0 0
          %1534 = vperm.xlu0 %1533, %v1456
          %v1535 = vpop.permute.xlu0 %1534
          %1538 = vset.pattern.permute.xlu0 0
          %1539 = vperm.xlu0 %1538, %v1457
          %v1540 = vpop.permute.xlu0 %1539
          %1543 = vset.pattern.permute.xlu0 0
          %1544 = vperm.xlu0 %1543, %v1458
          %v1545 = vpop.permute.xlu0 %1544
          %1548 = vset.pattern.permute.xlu0 0
          %1549 = vperm.xlu0 %1548, %v1459
          %v1550 = vpop.permute.xlu0 %1549
          %1553 = vset.pattern.permute.xlu0 0
          %1554 = vperm.xlu0 %1553, %v1460
          %v1555 = vpop.permute.xlu0 %1554
          %v1557 = vmul.f32 %v1461, %v1480
          %v1558 = vmul.f32 %v1462, %v1485
          %v1559 = vmul.f32 %v1463, %v1490
          %v1560 = vmul.f32 %v1464, %v1495
          %v1561 = vmul.f32 %v1465, %v1500
          %v1562 = vmul.f32 %v1466, %v1505
          %v1563 = vmul.f32 %v1467, %v1510
          %v1564 = vmul.f32 %v1468, %v1515
          %v1565 = vmul.f32 %v1469, %v1520
          %v1566 = vmul.f32 %v1470, %v1525
          %v1567 = vmul.f32 %v1471, %v1530
          %v1568 = vmul.f32 %v1472, %v1535
          %v1569 = vmul.f32 %v1473, %v1540
          %v1570 = vmul.f32 %v1474, %v1545
          %v1571 = vmul.f32 %v1475, %v1550
          %v1572 = vmul.f32 %v1476, %v1555
          %1573 = vst [vmem:[%s373] sm:$0xff] %v1557
          %1574 = vst [vmem:[%s373 + $0x8] sm:$0xff] %v1558
          %1575 = vst [vmem:[%s373 + $0x10] sm:$0xff] %v1559
          %1576 = vst [vmem:[%s373 + $0x18] sm:$0xff] %v1560
          %1577 = vst [vmem:[%s373 + $0x20] sm:$0xff] %v1561
          %1578 = vst [vmem:[%s373 + $0x28] sm:$0xff] %v1562
          %1579 = vst [vmem:[%s373 + $0x30] sm:$0xff] %v1563
          %1580 = vst [vmem:[%s373 + $0x38] sm:$0xff] %v1564
          %1581 = vst [vmem:[%s373 + $0x40] sm:$0xff] %v1565
          %1582 = vst [vmem:[%s373 + $0x48] sm:$0xff] %v1566
          %1583 = vst [vmem:[%s373 + $0x50] sm:$0xff] %v1567
          %1584 = vst [vmem:[%s373 + $0x58] sm:$0xff] %v1568
          %1585 = vst [vmem:[%s373 + $0x60] sm:$0xff] %v1569
          %1586 = vst [vmem:[%s373 + $0x68] sm:$0xff] %v1570
          %1587 = vst [vmem:[%s373 + $0x70] sm:$0xff] %v1571
          %1588 = vst [vmem:[%s373 + $0x78] sm:$0xff] %v1572
        $region60: #{tpu_custom_call.1} parent=35 // pred_fallthru
          _
        %s1589 = sand.u32 %s170, 1
        %s1590 = scalar_lea.sflag [#allocation7], %s1589
        %s1591 = sand.u32 %s170, 1
        %s1592 = smul.addr %s1591, 128
        %s1593 = scalar_lea.vmem [#allocation13], %s1592
        // Predicated region
        $region61: #{tpu_custom_call.1} parent=35 // pred_check
          %p1594 = pneg %p180
        $region62: #{tpu_custom_call.1} parent=35 // pred_check_branch
          %1596 = sbr.rel (%p1594) target = $region64
        $region63: #{tpu_custom_call.1} parent=35 // pred_region
          %s1597 = smul.u32 16, %s33
          %s1599 = ssub.s32 2048, 2048
          %1600 = vsyncadd %s1590, %s1599
          %s1601 = smul.addr %s32, 32
          %s1602 = sadd.s32 %s1597, %s1601
          %s1603 = smul.addr %s1602, 128
          %s1604 = scalar_lea.hbm %s4, %s1603
          %s1605 = sshll.u32 %s1593, 4
          %s1606 = int_to_ptr.vmem [resolvable:$true] %s1605
          %1611 = dma.vmem_to_hbm [thread:$0]  %s1606, 2048, %s1604, %s1590, 128, 128, 8
        $region64: #{tpu_custom_call.1} parent=35 // pred_fallthru
          _
      $region36: #{tpu_custom_call.1} parent=5 // pred_fallthru
        _
      %p1612 = scmp.le.s32.totalorder 2, %s22
      // Predicated region
      $region65: #{tpu_custom_call.1} parent=5 // pred_check
        %p1613 = pneg %p1612
      $region66: #{tpu_custom_call.1} parent=5 // pred_check_branch
        %1615 = sbr.rel (%p1613) target = $region68
      $region67: #{tpu_custom_call.1} parent=5 // pred_region
        %s1616 = ssub.s32 %s22, 2
        // Predicated region
        $region69: #{tpu_custom_call.1} parent=67 // pred_check
          %p1617 = pneg %p186
        $region70: #{tpu_custom_call.1} parent=67 // pred_check_branch
          %1619 = sbr.rel (%p1617) target = $region72
        $region71: #{tpu_custom_call.1} parent=67 // pred_region
          %s1620 = sand.u32 %s171, 1
          %s1621 = scalar_lea.sflag [#allocation7], %s1620
          %s1622 = sand.u32 %s171, 1
          %s1623 = smul.addr %s1622, 128
          %s1624 = scalar_lea.vmem [#allocation13], %s1623
          %1625 = dma.done %s1621, 2048
        $region72: #{tpu_custom_call.1} parent=67 // pred_fallthru
          _
      $region68: #{tpu_custom_call.1} parent=5 // pred_fallthru
        _
    $region6: #{tpu_custom_call.1} parent=1 // loop_footer
      %s26 = sadd.s32 1, %s22
    $region7: #{tpu_custom_call.1} parent=1 // loop_footer_branch
      %21 = sbr.rel target = $region3
    $region8: #{tpu_custom_call.1} parent=1 // loop_exit
      _
    %1626 = vsyncpa [#allocation6], 1
    %s1627 = scalar_lea.sflag [#allocation6], 1
    %1628 = vsyncpa %s1627, 1
    %1629 = vsyncpa [#allocation9], 1
    %s1630 = scalar_lea.sflag [#allocation9], 1
    %1631 = vsyncpa %s1630, 1
    %1632 = vsyncpa [#allocation12], 1
    %s1633 = scalar_lea.sflag [#allocation12], 1
    %1634 = vsyncpa %s1633, 1
    %1635 = vsyncpa [#allocation7], 1
    %s1636 = scalar_lea.sflag [#allocation7], 1
    %1637 = vsyncpa %s1636, 1

</llo_original>
